<compile_context>
chip_gen: v6e
topology: v6e:2x2x1
jax: 0.10.0
libtpu: 0.0.40
codegen_flags: <defaults>
</compile_context>

<pallas_src>
import jax
import jax.numpy as jnp
from jax.experimental import pallas as pl
from jax.experimental.pallas import tpu as pltpu

HEADS = 4          # GNNLayer always builds AttentionalPropagation(feature_dim, 4)
BN_EPS = 1e-5      # PyTorch BatchNorm1d default eps


# ----------------------------------------------------------------------------
# Pallas kernel: AttentionalPropagation.update(x, source) + residual add for a
# block of `bb` batch elements.  All 1x1 Conv1d layers are per-position
# matmuls over the channel (lane) dimension.
# ----------------------------------------------------------------------------
def _attn_prop_kernel(x_ref, src_ref,
                      wq_ref, bq_ref, wkv_ref, bkv_ref,
                      wm_ref, bm_ref,
                      w1x_ref, w1m_ref, b1_ref,
                      w2_ref, b2_ref,
                      out_ref):
    x = x_ref[...]          # (bb, N, D) f32
    src = src_ref[...]      # (bb, N, D) f32
    bb, n, d = x.shape
    hd = d // HEADS

    x2 = x.reshape(bb * n, d)                 # flatten batch -> matmul M-dim
    x2b = x2.astype(jnp.bfloat16)
    s2b = src.reshape(bb * n, d).astype(jnp.bfloat16)

    # Fused projections.  1/sqrt(hd) is pre-folded into wq/bq; k and v share a
    # single (D, 2D) matmul (better MXU N-dim fill, one bias pass).
    q = (jnp.dot(x2b, wq_ref[...], preferred_element_type=jnp.float32)
         + bq_ref[...]).reshape(bb, n, d)
    kv = jnp.dot(s2b, wkv_ref[...], preferred_element_type=jnp.float32) + bkv_ref[...]
    k = kv[:, :d].reshape(bb, n, d)
    v = kv[:, d:].reshape(bb, n, d)

    # Multi-head attention.  Channels were pre-permuted head-major in the
    # wrapper, so each head is a contiguous lane slice.  The merge Conv1d is
    # accumulated per head (no lane-axis concatenation).
    # TODO(synk): for realistic SuperGlue sizes (N ~ 1k-2k) the (N, N) score
    # matrix should be tiled with an online-softmax (flash-style) inner loop
    # to stay inside v7x's 64 MiB VMEM; at the small demo N it fits trivially.
    wm_full = wm_ref[...]                                      # (D, D) bf16
    msg = jnp.zeros((bb * n, d), jnp.float32) + bm_ref[...]    # start from merge bias
    for h in range(HEADS):
        sl = slice(h * hd, (h + 1) * hd)
        qh = q[:, :, sl].astype(jnp.bfloat16)
        kh = k[:, :, sl].astype(jnp.bfloat16)
        vh = v[:, :, sl].astype(jnp.bfloat16)
        s = jnp.einsum('bqd,bkd->bqk', qh, kh,
                       preferred_element_type=jnp.float32)     # (bb, N, N)
        s = s - jnp.max(s, axis=-1, keepdims=True)
        p = jnp.exp(s)
        p = p * pl.reciprocal(jnp.sum(p, axis=-1, keepdims=True), approx=True)
        oh = jnp.einsum('bqk,bkd->bqd', p.astype(jnp.bfloat16), vh,
                        preferred_element_type=jnp.float32)    # (bb, N, hd)
        msg += jnp.dot(oh.reshape(bb * n, hd).astype(jnp.bfloat16),
                       wm_full[sl, :],
                       preferred_element_type=jnp.float32)

    # MLP([2D, 2D, D]): first Conv1d has BatchNorm folded in host-side and its
    # weight split so that concat([x, message]) is never materialized.
    # TODO(synk): BatchNorm1d implemented with eval-mode running statistics;
    # training-mode batch statistics are not computed here.
    y = (jnp.dot(x2b, w1x_ref[...], preferred_element_type=jnp.float32)
         + jnp.dot(msg.astype(jnp.bfloat16), w1m_ref[...],
                   preferred_element_type=jnp.float32)
         + b1_ref[...])
    y = jnp.maximum(y, 0.0)
    delta = (jnp.dot(y.astype(jnp.bfloat16), w2_ref[...],
                     preferred_element_type=jnp.float32) + b2_ref[...])

    # GNNLayer residual: desc = desc + delta
    out_ref[...] = (x2 + delta).reshape(bb, n, d)


def _pick_batch_block(total_b):
    """Largest divisor of total_b that still leaves >=2 grid steps (so the
    'parallel' axis can spread across megacore / v7x's 2 TensorCores)."""
    if total_b <= 1:
        return 1
    for cand in range(total_b // 2, 0, -1):
        if total_b % cand == 0:
            return cand
    return 1


def _update_pallas(x_bnd, src_bnd, kparams):
    TB, N, D = x_bnd.shape
    bb = _pick_batch_block(TB)
    data_spec = pl.BlockSpec((bb, N, D), lambda b: (b, 0, 0))
    # Constant weight blocks (index_map always (0, 0)).  On v7x these could be
    # single-buffered via pipeline_mode=pl.Buffered(1) to save VMEM.
    param_specs = [pl.BlockSpec(p.shape, lambda b: (0, 0)) for p in kparams]
    return pl.pallas_call(
        _attn_prop_kernel,
        out_shape=jax.ShapeDtypeStruct((TB, N, D), jnp.float32),
        grid=(TB // bb,),
        in_specs=[data_spec, data_spec] + param_specs,
        out_specs=pl.BlockSpec((bb, N, D), lambda b: (b, 0, 0)),
        compiler_params=pltpu.CompilerParams(dimension_semantics=("parallel",)),
    )(x_bnd, src_bnd, *kparams)


# ----------------------------------------------------------------------------
# Parameter setup (deterministic, synthetic), matching module __init__ shapes.
# ----------------------------------------------------------------------------
def init_gnn_params(key, D):
    ks = jax.random.split(key, 13)

    def w(k, o, i):
        return (jax.random.normal(k, (o, i), jnp.float32) / jnp.sqrt(i)).astype(jnp.float32)

    def b(k, o):
        return (0.1 * jax.random.normal(k, (o,), jnp.float32)).astype(jnp.float32)

    return dict(
        wq=w(ks[0], D, D), bq=b(ks[1], D),
        wk=w(ks[2], D, D), bk=b(ks[3], D),
        wv=w(ks[4], D, D), bv=b(ks[5], D),
        wm=w(ks[6], D, D), bm=b(ks[7], D),
        w1=w(ks[8], 2 * D, 2 * D), b1=b(ks[9], 2 * D),
        gamma=1.0 + 0.1 * jax.random.normal(ks[10], (2 * D,), jnp.float32),
        beta=0.1 * jax.random.normal(ks[11], (2 * D,), jnp.float32),
        mean=jnp.zeros((2 * D,), jnp.float32),   # BN running_mean init
        var=jnp.ones((2 * D,), jnp.float32),     # BN running_var init
        w2=w(ks[12], D, 2 * D),
        b2=jnp.zeros((D,), jnp.float32),         # nn.init.constant_(mlp[-1].bias, 0.0)
    )


def prepare_kernel_params(P, D):
    """One-time host-side weight prep:
       * transpose weights for x @ W style matmuls, cast weights to bf16;
       * permute q/k/v output channels (and merge input channels) head-major
         so the kernel slices contiguous lanes per head (PyTorch's
         .view(b, dim, h, n) means channel c = d_idx*H + head; kernel uses
         c' = head*hd + d_idx);
       * fold 1/sqrt(hd) into Wq/bq;
       * fuse Wk|Wv into a single (D, 2D) matrix;
       * fold eval-mode BatchNorm into the first MLP conv and split it into
         the x-part and message-part (no concat in the kernel)."""
    hd = D // HEADS
    perm = jnp.arange(D).reshape(hd, HEADS).T.reshape(-1)
    scale = 1.0 / (hd ** 0.5)

    def row(v):
        return v.reshape(1, -1).astype(jnp.float32)

    wq = (P['wq'][perm, :].T * scale).astype(jnp.bfloat16)
    bq = row(P['bq'][perm] * scale)
    wkv = jnp.concatenate([P['wk'][perm, :].T, P['wv'][perm, :].T],
                          axis=1).astype(jnp.bfloat16)          # (D, 2D)
    bkv = row(jnp.concatenate([P['bk'][perm], P['bv'][perm]]))
    wm = P['wm'][:, perm].T.astype(jnp.bfloat16)                # rows head-major
    bm = row(P['bm'])

    bn_scale = P['gamma'] / jnp.sqrt(P['var'] + BN_EPS)
    w1 = P['w1'].T * bn_scale[None, :]                          # (2D_in, 2D_out)
    b1 = (P['b1'] - P['mean']) * bn_scale + P['beta']
    w1x = w1[:D, :].astype(jnp.bfloat16)
    w1m = w1[D:, :].astype(jnp.bfloat16)
    w2 = P['w2'].T.astype(jnp.bfloat16)
    b2 = row(P['b2'])

    return [wq, bq, wkv, bkv, wm, bm, w1x, w1m, row(b1), w2, b2]


# ----------------------------------------------------------------------------
# GNNLayer forward: both descriptors share the same update weights, so both
# updates are stacked along batch and handled by a single pallas_call.
# ----------------------------------------------------------------------------
def gnn_layer_forward(desc0, desc1, kparams, layer_type='cross'):
    assert layer_type in ('cross', 'self')
    if layer_type == 'cross':
        src0, src1 = desc1, desc0
    else:
        src0, src1 = desc0, desc1
    B = desc0.shape[0]

    # (B, D, N) -> (B, N, D), stack both updates along batch.
    x_all = jnp.concatenate([jnp.transpose(desc0, (0, 2, 1)),
                             jnp.transpose(desc1, (0, 2, 1))], axis=0)
    s_all = jnp.concatenate([jnp.transpose(src0, (0, 2, 1)),
                             jnp.transpose(src1, (0, 2, 1))], axis=0)

    out = _update_pallas(x_all, s_all, kparams)

    out0 = jnp.transpose(out[:B], (0, 2, 1))   # back to (B, D, N)
    out1 = jnp.transpose(out[B:], (0, 2, 1))
    return out0, out1


# ----------------------------------------------------------------------------
# Pure-JAX reference following the PyTorch code exactly (original channel
# ordering, einsum formulation, f32) for validation.
# ----------------------------------------------------------------------------
def _conv1d(w, b, t):  # t: (B, Cin, N), w: (Cout, Cin)
    return jnp.einsum('oi,bin->bon', w, t) + b[None, :, None]


def ref_update(x, src, P):
    B, D, N = x.shape
    hd = D // HEADS
    q = _conv1d(P['wq'], P['bq'], x).reshape(B, hd, HEADS, N)
    k = _conv1d(P['wk'], P['bk'], src).reshape(B, hd, HEADS, N)
    v = _conv1d(P['wv'], P['bv'], src).reshape(B, hd, HEADS, N)
    scores = jnp.einsum('bdhn,bdhm->bhnm', q, k) / (hd ** 0.5)
    prob = jax.nn.softmax(scores, axis=-1)
    attn = jnp.einsum('bhnm,bdhm->bdhn', prob, v).reshape(B, D, N)
    message = _conv1d(P['wm'], P['bm'], attn)
    cat = jnp.concatenate([x, message], axis=1)
    y = _conv1d(P['w1'], P['b1'], cat)
    y = (y - P['mean'][None, :, None]) * (
        P['gamma'][None, :, None] / jnp.sqrt(P['var'][None, :, None] + BN_EPS)
    ) + P['beta'][None, :, None]
    y = jnp.maximum(y, 0.0)
    delta = _conv1d(P['w2'], P['b2'], y)
    return x + delta


if __name__ == "__main__":
    key = jax.random.PRNGKey(0)
    k0, k1, kp = jax.random.split(key, 3)
    B, D, N = 2, 32, 16          # feature_dim=32 (divisible by 4 heads), seq=16
    desc0 = jax.random.normal(k0, (B, D, N), jnp.float32)
    desc1 = jax.random.normal(k1, (B, D, N), jnp.float32)
    P = init_gnn_params(kp, D)

    # Weight prep done ONCE, outside the forward hot path.
    kparams = prepare_kernel_params(P, D)

    fwd = jax.jit(gnn_layer_forward, static_argnames=('layer_type',))
    out0, out1 = fwd(desc0, desc1, kparams, layer_type='cross')
    out0 = jax.block_until_ready(out0)
    out1 = jax.block_until_ready(out1)

    # Validate against the pure-f32 reference ('cross': src0=desc1, src1=desc0).
    # bf16 matmul operands + approx reciprocal -> looser tolerance than pure f32.
    r0 = ref_update(desc0, desc1, P)
    r1 = ref_update(desc1, desc0, P)
    assert jnp.allclose(out0, r0, atol=7e-2, rtol=7e-2), float(jnp.max(jnp.abs(out0 - r0)))
    assert jnp.allclose(out1, r1, atol=7e-2, rtol=7e-2), float(jnp.max(jnp.abs(out1 - r1)))

    print("KERNEL_OK")
</pallas_src>

<mosaic_0001>
module attributes {stable_mosaic.version = 11 : i64} {
  func.func @_attn_prop_kernel(%arg0: i32, %arg1: memref<2x16x32xf32, #tpu.memory_space<vmem>>, %arg2: memref<2x16x32xf32, #tpu.memory_space<vmem>>, %arg3: memref<32x32xbf16, #tpu.memory_space<vmem>>, %arg4: memref<1x32xf32, #tpu.memory_space<vmem>>, %arg5: memref<32x64xbf16, #tpu.memory_space<vmem>>, %arg6: memref<1x64xf32, #tpu.memory_space<vmem>>, %arg7: memref<32x32xbf16, #tpu.memory_space<vmem>>, %arg8: memref<1x32xf32, #tpu.memory_space<vmem>>, %arg9: memref<32x64xbf16, #tpu.memory_space<vmem>>, %arg10: memref<32x64xbf16, #tpu.memory_space<vmem>>, %arg11: memref<1x64xf32, #tpu.memory_space<vmem>>, %arg12: memref<64x32xbf16, #tpu.memory_space<vmem>>, %arg13: memref<1x32xf32, #tpu.memory_space<vmem>>, %arg14: memref<2x16x32xf32, #tpu.memory_space<vmem>>) attributes {dimension_semantics = [#tpu.dimension_semantics<parallel>], iteration_bounds = array<i64: 2>, scalar_prefetch = 0 : i64, scratch_operands = 0 : i64, tpu.core_type = #tpu.core_type<tc>, window_params = [{transform_indices = @transform_0, window_bounds = array<i64: 2, 16, 32>}, {transform_indices = @transform_1, window_bounds = array<i64: 2, 16, 32>}, {pipeline_mode = #tpu.pipeline_mode<synchronous>, transform_indices = @transform_2, window_bounds = array<i64: 32, 32>}, {pipeline_mode = #tpu.pipeline_mode<synchronous>, transform_indices = @transform_3, window_bounds = array<i64: 1, 32>}, {pipeline_mode = #tpu.pipeline_mode<synchronous>, transform_indices = @transform_4, window_bounds = array<i64: 32, 64>}, {pipeline_mode = #tpu.pipeline_mode<synchronous>, transform_indices = @transform_5, window_bounds = array<i64: 1, 64>}, {pipeline_mode = #tpu.pipeline_mode<synchronous>, transform_indices = @transform_6, window_bounds = array<i64: 32, 32>}, {pipeline_mode = #tpu.pipeline_mode<synchronous>, transform_indices = @transform_7, window_bounds = array<i64: 1, 32>}, {pipeline_mode = #tpu.pipeline_mode<synchronous>, transform_indices = @transform_8, window_bounds = array<i64: 32, 64>}, {pipeline_mode = #tpu.pipeline_mode<synchronous>, transform_indices = @transform_9, window_bounds = array<i64: 32, 64>}, {pipeline_mode = #tpu.pipeline_mode<synchronous>, transform_indices = @transform_10, window_bounds = array<i64: 1, 64>}, {pipeline_mode = #tpu.pipeline_mode<synchronous>, transform_indices = @transform_11, window_bounds = array<i64: 64, 32>}, {pipeline_mode = #tpu.pipeline_mode<synchronous>, transform_indices = @transform_12, window_bounds = array<i64: 1, 32>}, {transform_indices = @transform_13, window_bounds = array<i64: 2, 16, 32>}]} {
    %c0 = arith.constant 0 : index
    %c0_0 = arith.constant 0 : index
    %c0_1 = arith.constant 0 : index
    %0 = vector.load %arg1[%c0, %c0_0, %c0_1] : memref<2x16x32xf32, #tpu.memory_space<vmem>>, vector<2x16x32xf32>
    %c0_2 = arith.constant 0 : index
    %c0_3 = arith.constant 0 : index
    %c0_4 = arith.constant 0 : index
    %1 = vector.load %arg2[%c0_2, %c0_3, %c0_4] : memref<2x16x32xf32, #tpu.memory_space<vmem>>, vector<2x16x32xf32>
    %2 = vector.shape_cast %0 : vector<2x16x32xf32> to vector<32x32xf32>
    %3 = arith.truncf %2 : vector<32x32xf32> to vector<32x32xbf16>
    %4 = vector.shape_cast %1 : vector<2x16x32xf32> to vector<32x32xf32>
    %5 = arith.truncf %4 : vector<32x32xf32> to vector<32x32xbf16>
    %c0_5 = arith.constant 0 : index
    %c0_6 = arith.constant 0 : index
    %6 = vector.load %arg3[%c0_5, %c0_6] : memref<32x32xbf16, #tpu.memory_space<vmem>>, vector<32x32xbf16>
    %cst = arith.constant dense<0.000000e+00> : vector<32x32xf32>
    %7 = tpu.matmul %3, %6, %cst {dimension_numbers = #tpu.dot_dimension_numbers<[1], [0], [0], [1], [0, 0, 1, 1], [], []>} : vector<32x32xbf16>, vector<32x32xbf16>, vector<32x32xf32> -> vector<32x32xf32>
    %c0_7 = arith.constant 0 : index
    %c0_8 = arith.constant 0 : index
    %8 = vector.load %arg4[%c0_7, %c0_8] : memref<1x32xf32, #tpu.memory_space<vmem>>, vector<1x32xf32>
    %9 = vector.broadcast %8 : vector<1x32xf32> to vector<32x32xf32>
    %10 = arith.addf %7, %9 : vector<32x32xf32>
    %11 = vector.shape_cast %10 : vector<32x32xf32> to vector<2x16x32xf32>
    %c0_9 = arith.constant 0 : index
    %c0_10 = arith.constant 0 : index
    %12 = vector.load %arg5[%c0_9, %c0_10] : memref<32x64xbf16, #tpu.memory_space<vmem>>, vector<32x64xbf16>
    %cst_11 = arith.constant dense<0.000000e+00> : vector<32x64xf32>
    %13 = tpu.matmul %5, %12, %cst_11 {dimension_numbers = #tpu.dot_dimension_numbers<[1], [0], [0], [1], [0, 0, 1, 1], [], []>} : vector<32x32xbf16>, vector<32x64xbf16>, vector<32x64xf32> -> vector<32x64xf32>
    %c0_12 = arith.constant 0 : index
    %c0_13 = arith.constant 0 : index
    %14 = vector.load %arg6[%c0_12, %c0_13] : memref<1x64xf32, #tpu.memory_space<vmem>>, vector<1x64xf32>
    %15 = vector.broadcast %14 : vector<1x64xf32> to vector<32x64xf32>
    %16 = arith.addf %13, %15 : vector<32x64xf32>
    %17 = vector.extract_strided_slice %16 {offsets = [0, 0], sizes = [32, 32], strides = [1, 1]} : vector<32x64xf32> to vector<32x32xf32>
    %18 = vector.shape_cast %17 : vector<32x32xf32> to vector<2x16x32xf32>
    %19 = vector.extract_strided_slice %16 {offsets = [0, 32], sizes = [32, 32], strides = [1, 1]} : vector<32x64xf32> to vector<32x32xf32>
    %20 = vector.shape_cast %19 : vector<32x32xf32> to vector<2x16x32xf32>
    %c0_14 = arith.constant 0 : index
    %c0_15 = arith.constant 0 : index
    %21 = vector.load %arg7[%c0_14, %c0_15] : memref<32x32xbf16, #tpu.memory_space<vmem>>, vector<32x32xbf16>
    %cst_16 = arith.constant 0.000000e+00 : f32
    %22 = vector.broadcast %cst_16 : f32 to vector<32x32xf32>
    %c0_17 = arith.constant 0 : index
    %c0_18 = arith.constant 0 : index
    %23 = vector.load %arg8[%c0_17, %c0_18] : memref<1x32xf32, #tpu.memory_space<vmem>>, vector<1x32xf32>
    %24 = vector.broadcast %23 : vector<1x32xf32> to vector<32x32xf32>
    %25 = arith.addf %22, %24 : vector<32x32xf32>
    %26 = vector.extract_strided_slice %11 {offsets = [0, 0, 0], sizes = [2, 16, 8], strides = [1, 1, 1]} : vector<2x16x32xf32> to vector<2x16x8xf32>
    %27 = arith.truncf %26 : vector<2x16x8xf32> to vector<2x16x8xbf16>
    %28 = vector.extract_strided_slice %18 {offsets = [0, 0, 0], sizes = [2, 16, 8], strides = [1, 1, 1]} : vector<2x16x32xf32> to vector<2x16x8xf32>
    %29 = arith.truncf %28 : vector<2x16x8xf32> to vector<2x16x8xbf16>
    %30 = vector.extract_strided_slice %20 {offsets = [0, 0, 0], sizes = [2, 16, 8], strides = [1, 1, 1]} : vector<2x16x32xf32> to vector<2x16x8xf32>
    %31 = arith.truncf %30 : vector<2x16x8xf32> to vector<2x16x8xbf16>
    "tpu.trace_start"() <{level = 10 : i32, message = "bqd,bkd->bqk"}> : () -> ()
    %cst_19 = arith.constant dense<0.000000e+00> : vector<2x16x16xf32>
    %32 = tpu.matmul %27, %29, %cst_19 {dimension_numbers = #tpu.dot_dimension_numbers<[2], [2], [1], [1], [0, 0, 0, 1, 1, 1], [0], [0]>} : vector<2x16x8xbf16>, vector<2x16x8xbf16>, vector<2x16x16xf32> -> vector<2x16x16xf32>
    "tpu.trace_stop"() : () -> ()
    %cst_20 = arith.constant dense<0xFF800000> : vector<2x16xf32>
    %33 = vector.multi_reduction <maximumf>, %32, %cst_20 [2] : vector<2x16x16xf32> to vector<2x16xf32>
    %34 = vector.shape_cast %33 : vector<2x16xf32> to vector<2x16x1xf32>
    %35 = vector.broadcast %34 : vector<2x16x1xf32> to vector<2x16x16xf32>
    %36 = arith.subf %32, %35 : vector<2x16x16xf32>
    %37 = math.exp %36 : vector<2x16x16xf32>
    %cst_21 = arith.constant dense<0.000000e+00> : vector<2x16xf32>
    %38 = vector.multi_reduction <add>, %37, %cst_21 [2] : vector<2x16x16xf32> to vector<2x16xf32>
    %39 = vector.shape_cast %38 : vector<2x16xf32> to vector<2x16x1xf32>
    %40 = tpu.reciprocal %39 {approx = true} : vector<2x16x1xf32> -> vector<2x16x1xf32>
    %41 = vector.broadcast %40 : vector<2x16x1xf32> to vector<2x16x16xf32>
    %42 = arith.mulf %37, %41 : vector<2x16x16xf32>
    %43 = arith.truncf %42 : vector<2x16x16xf32> to vector<2x16x16xbf16>
    "tpu.trace_start"() <{level = 10 : i32, message = "bqk,bkd->bqd"}> : () -> ()
    %cst_22 = arith.constant dense<0.000000e+00> : vector<2x16x8xf32>
    %44 = tpu.matmul %43, %31, %cst_22 {dimension_numbers = #tpu.dot_dimension_numbers<[2], [1], [1], [2], [0, 0, 0, 1, 1, 2], [0], [0]>} : vector<2x16x16xbf16>, vector<2x16x8xbf16>, vector<2x16x8xf32> -> vector<2x16x8xf32>
    "tpu.trace_stop"() : () -> ()
    %45 = vector.shape_cast %44 : vector<2x16x8xf32> to vector<32x8xf32>
    %46 = arith.truncf %45 : vector<32x8xf32> to vector<32x8xbf16>
    %47 = vector.extract_strided_slice %21 {offsets = [0, 0], sizes = [8, 32], strides = [1, 1]} : vector<32x32xbf16> to vector<8x32xbf16>
    %cst_23 = arith.constant dense<0.000000e+00> : vector<32x32xf32>
    %48 = tpu.matmul %46, %47, %cst_23 {dimension_numbers = #tpu.dot_dimension_numbers<[1], [0], [0], [1], [0, 0, 1, 1], [], []>} : vector<32x8xbf16>, vector<8x32xbf16>, vector<32x32xf32> -> vector<32x32xf32>
    %49 = arith.addf %25, %48 : vector<32x32xf32>
    %50 = vector.extract_strided_slice %11 {offsets = [0, 0, 8], sizes = [2, 16, 8], strides = [1, 1, 1]} : vector<2x16x32xf32> to vector<2x16x8xf32>
    %51 = arith.truncf %50 : vector<2x16x8xf32> to vector<2x16x8xbf16>
    %52 = vector.extract_strided_slice %18 {offsets = [0, 0, 8], sizes = [2, 16, 8], strides = [1, 1, 1]} : vector<2x16x32xf32> to vector<2x16x8xf32>
    %53 = arith.truncf %52 : vector<2x16x8xf32> to vector<2x16x8xbf16>
    %54 = vector.extract_strided_slice %20 {offsets = [0, 0, 8], sizes = [2, 16, 8], strides = [1, 1, 1]} : vector<2x16x32xf32> to vector<2x16x8xf32>
    %55 = arith.truncf %54 : vector<2x16x8xf32> to vector<2x16x8xbf16>
    "tpu.trace_start"() <{level = 10 : i32, message = "bqd,bkd->bqk"}> : () -> ()
    %cst_24 = arith.constant dense<0.000000e+00> : vector<2x16x16xf32>
    %56 = tpu.matmul %51, %53, %cst_24 {dimension_numbers = #tpu.dot_dimension_numbers<[2], [2], [1], [1], [0, 0, 0, 1, 1, 1], [0], [0]>} : vector<2x16x8xbf16>, vector<2x16x8xbf16>, vector<2x16x16xf32> -> vector<2x16x16xf32>
    "tpu.trace_stop"() : () -> ()
    %cst_25 = arith.constant dense<0xFF800000> : vector<2x16xf32>
    %57 = vector.multi_reduction <maximumf>, %56, %cst_25 [2] : vector<2x16x16xf32> to vector<2x16xf32>
    %58 = vector.shape_cast %57 : vector<2x16xf32> to vector<2x16x1xf32>
    %59 = vector.broadcast %58 : vector<2x16x1xf32> to vector<2x16x16xf32>
    %60 = arith.subf %56, %59 : vector<2x16x16xf32>
    %61 = math.exp %60 : vector<2x16x16xf32>
    %cst_26 = arith.constant dense<0.000000e+00> : vector<2x16xf32>
    %62 = vector.multi_reduction <add>, %61, %cst_26 [2] : vector<2x16x16xf32> to vector<2x16xf32>
    %63 = vector.shape_cast %62 : vector<2x16xf32> to vector<2x16x1xf32>
    %64 = tpu.reciprocal %63 {approx = true} : vector<2x16x1xf32> -> vector<2x16x1xf32>
    %65 = vector.broadcast %64 : vector<2x16x1xf32> to vector<2x16x16xf32>
    %66 = arith.mulf %61, %65 : vector<2x16x16xf32>
    %67 = arith.truncf %66 : vector<2x16x16xf32> to vector<2x16x16xbf16>
    "tpu.trace_start"() <{level = 10 : i32, message = "bqk,bkd->bqd"}> : () -> ()
    %cst_27 = arith.constant dense<0.000000e+00> : vector<2x16x8xf32>
    %68 = tpu.matmul %67, %55, %cst_27 {dimension_numbers = #tpu.dot_dimension_numbers<[2], [1], [1], [2], [0, 0, 0, 1, 1, 2], [0], [0]>} : vector<2x16x16xbf16>, vector<2x16x8xbf16>, vector<2x16x8xf32> -> vector<2x16x8xf32>
    "tpu.trace_stop"() : () -> ()
    %69 = vector.shape_cast %68 : vector<2x16x8xf32> to vector<32x8xf32>
    %70 = arith.truncf %69 : vector<32x8xf32> to vector<32x8xbf16>
    %71 = vector.extract_strided_slice %21 {offsets = [8, 0], sizes = [8, 32], strides = [1, 1]} : vector<32x32xbf16> to vector<8x32xbf16>
    %cst_28 = arith.constant dense<0.000000e+00> : vector<32x32xf32>
    %72 = tpu.matmul %70, %71, %cst_28 {dimension_numbers = #tpu.dot_dimension_numbers<[1], [0], [0], [1], [0, 0, 1, 1], [], []>} : vector<32x8xbf16>, vector<8x32xbf16>, vector<32x32xf32> -> vector<32x32xf32>
    %73 = arith.addf %49, %72 : vector<32x32xf32>
    %74 = vector.extract_strided_slice %11 {offsets = [0, 0, 16], sizes = [2, 16, 8], strides = [1, 1, 1]} : vector<2x16x32xf32> to vector<2x16x8xf32>
    %75 = arith.truncf %74 : vector<2x16x8xf32> to vector<2x16x8xbf16>
    %76 = vector.extract_strided_slice %18 {offsets = [0, 0, 16], sizes = [2, 16, 8], strides = [1, 1, 1]} : vector<2x16x32xf32> to vector<2x16x8xf32>
    %77 = arith.truncf %76 : vector<2x16x8xf32> to vector<2x16x8xbf16>
    %78 = vector.extract_strided_slice %20 {offsets = [0, 0, 16], sizes = [2, 16, 8], strides = [1, 1, 1]} : vector<2x16x32xf32> to vector<2x16x8xf32>
    %79 = arith.truncf %78 : vector<2x16x8xf32> to vector<2x16x8xbf16>
    "tpu.trace_start"() <{level = 10 : i32, message = "bqd,bkd->bqk"}> : () -> ()
    %cst_29 = arith.constant dense<0.000000e+00> : vector<2x16x16xf32>
    %80 = tpu.matmul %75, %77, %cst_29 {dimension_numbers = #tpu.dot_dimension_numbers<[2], [2], [1], [1], [0, 0, 0, 1, 1, 1], [0], [0]>} : vector<2x16x8xbf16>, vector<2x16x8xbf16>, vector<2x16x16xf32> -> vector<2x16x16xf32>
    "tpu.trace_stop"() : () -> ()
    %cst_30 = arith.constant dense<0xFF800000> : vector<2x16xf32>
    %81 = vector.multi_reduction <maximumf>, %80, %cst_30 [2] : vector<2x16x16xf32> to vector<2x16xf32>
    %82 = vector.shape_cast %81 : vector<2x16xf32> to vector<2x16x1xf32>
    %83 = vector.broadcast %82 : vector<2x16x1xf32> to vector<2x16x16xf32>
    %84 = arith.subf %80, %83 : vector<2x16x16xf32>
    %85 = math.exp %84 : vector<2x16x16xf32>
    %cst_31 = arith.constant dense<0.000000e+00> : vector<2x16xf32>
    %86 = vector.multi_reduction <add>, %85, %cst_31 [2] : vector<2x16x16xf32> to vector<2x16xf32>
    %87 = vector.shape_cast %86 : vector<2x16xf32> to vector<2x16x1xf32>
    %88 = tpu.reciprocal %87 {approx = true} : vector<2x16x1xf32> -> vector<2x16x1xf32>
    %89 = vector.broadcast %88 : vector<2x16x1xf32> to vector<2x16x16xf32>
    %90 = arith.mulf %85, %89 : vector<2x16x16xf32>
    %91 = arith.truncf %90 : vector<2x16x16xf32> to vector<2x16x16xbf16>
    "tpu.trace_start"() <{level = 10 : i32, message = "bqk,bkd->bqd"}> : () -> ()
    %cst_32 = arith.constant dense<0.000000e+00> : vector<2x16x8xf32>
    %92 = tpu.matmul %91, %79, %cst_32 {dimension_numbers = #tpu.dot_dimension_numbers<[2], [1], [1], [2], [0, 0, 0, 1, 1, 2], [0], [0]>} : vector<2x16x16xbf16>, vector<2x16x8xbf16>, vector<2x16x8xf32> -> vector<2x16x8xf32>
    "tpu.trace_stop"() : () -> ()
    %93 = vector.shape_cast %92 : vector<2x16x8xf32> to vector<32x8xf32>
    %94 = arith.truncf %93 : vector<32x8xf32> to vector<32x8xbf16>
    %95 = vector.extract_strided_slice %21 {offsets = [16, 0], sizes = [8, 32], strides = [1, 1]} : vector<32x32xbf16> to vector<8x32xbf16>
    %cst_33 = arith.constant dense<0.000000e+00> : vector<32x32xf32>
    %96 = tpu.matmul %94, %95, %cst_33 {dimension_numbers = #tpu.dot_dimension_numbers<[1], [0], [0], [1], [0, 0, 1, 1], [], []>} : vector<32x8xbf16>, vector<8x32xbf16>, vector<32x32xf32> -> vector<32x32xf32>
    %97 = arith.addf %73, %96 : vector<32x32xf32>
    %98 = vector.extract_strided_slice %11 {offsets = [0, 0, 24], sizes = [2, 16, 8], strides = [1, 1, 1]} : vector<2x16x32xf32> to vector<2x16x8xf32>
    %99 = arith.truncf %98 : vector<2x16x8xf32> to vector<2x16x8xbf16>
    %100 = vector.extract_strided_slice %18 {offsets = [0, 0, 24], sizes = [2, 16, 8], strides = [1, 1, 1]} : vector<2x16x32xf32> to vector<2x16x8xf32>
    %101 = arith.truncf %100 : vector<2x16x8xf32> to vector<2x16x8xbf16>
    %102 = vector.extract_strided_slice %20 {offsets = [0, 0, 24], sizes = [2, 16, 8], strides = [1, 1, 1]} : vector<2x16x32xf32> to vector<2x16x8xf32>
    %103 = arith.truncf %102 : vector<2x16x8xf32> to vector<2x16x8xbf16>
    "tpu.trace_start"() <{level = 10 : i32, message = "bqd,bkd->bqk"}> : () -> ()
    %cst_34 = arith.constant dense<0.000000e+00> : vector<2x16x16xf32>
    %104 = tpu.matmul %99, %101, %cst_34 {dimension_numbers = #tpu.dot_dimension_numbers<[2], [2], [1], [1], [0, 0, 0, 1, 1, 1], [0], [0]>} : vector<2x16x8xbf16>, vector<2x16x8xbf16>, vector<2x16x16xf32> -> vector<2x16x16xf32>
    "tpu.trace_stop"() : () -> ()
    %cst_35 = arith.constant dense<0xFF800000> : vector<2x16xf32>
    %105 = vector.multi_reduction <maximumf>, %104, %cst_35 [2] : vector<2x16x16xf32> to vector<2x16xf32>
    %106 = vector.shape_cast %105 : vector<2x16xf32> to vector<2x16x1xf32>
    %107 = vector.broadcast %106 : vector<2x16x1xf32> to vector<2x16x16xf32>
    %108 = arith.subf %104, %107 : vector<2x16x16xf32>
    %109 = math.exp %108 : vector<2x16x16xf32>
    %cst_36 = arith.constant dense<0.000000e+00> : vector<2x16xf32>
    %110 = vector.multi_reduction <add>, %109, %cst_36 [2] : vector<2x16x16xf32> to vector<2x16xf32>
    %111 = vector.shape_cast %110 : vector<2x16xf32> to vector<2x16x1xf32>
    %112 = tpu.reciprocal %111 {approx = true} : vector<2x16x1xf32> -> vector<2x16x1xf32>
    %113 = vector.broadcast %112 : vector<2x16x1xf32> to vector<2x16x16xf32>
    %114 = arith.mulf %109, %113 : vector<2x16x16xf32>
    %115 = arith.truncf %114 : vector<2x16x16xf32> to vector<2x16x16xbf16>
    "tpu.trace_start"() <{level = 10 : i32, message = "bqk,bkd->bqd"}> : () -> ()
    %cst_37 = arith.constant dense<0.000000e+00> : vector<2x16x8xf32>
    %116 = tpu.matmul %115, %103, %cst_37 {dimension_numbers = #tpu.dot_dimension_numbers<[2], [1], [1], [2], [0, 0, 0, 1, 1, 2], [0], [0]>} : vector<2x16x16xbf16>, vector<2x16x8xbf16>, vector<2x16x8xf32> -> vector<2x16x8xf32>
    "tpu.trace_stop"() : () -> ()
    %117 = vector.shape_cast %116 : vector<2x16x8xf32> to vector<32x8xf32>
    %118 = arith.truncf %117 : vector<32x8xf32> to vector<32x8xbf16>
    %119 = vector.extract_strided_slice %21 {offsets = [24, 0], sizes = [8, 32], strides = [1, 1]} : vector<32x32xbf16> to vector<8x32xbf16>
    %cst_38 = arith.constant dense<0.000000e+00> : vector<32x32xf32>
    %120 = tpu.matmul %118, %119, %cst_38 {dimension_numbers = #tpu.dot_dimension_numbers<[1], [0], [0], [1], [0, 0, 1, 1], [], []>} : vector<32x8xbf16>, vector<8x32xbf16>, vector<32x32xf32> -> vector<32x32xf32>
    %121 = arith.addf %97, %120 : vector<32x32xf32>
    %c0_39 = arith.constant 0 : index
    %c0_40 = arith.constant 0 : index
    %122 = vector.load %arg9[%c0_39, %c0_40] : memref<32x64xbf16, #tpu.memory_space<vmem>>, vector<32x64xbf16>
    %cst_41 = arith.constant dense<0.000000e+00> : vector<32x64xf32>
    %123 = tpu.matmul %3, %122, %cst_41 {dimension_numbers = #tpu.dot_dimension_numbers<[1], [0], [0], [1], [0, 0, 1, 1], [], []>} : vector<32x32xbf16>, vector<32x64xbf16>, vector<32x64xf32> -> vector<32x64xf32>
    %124 = arith.truncf %121 : vector<32x32xf32> to vector<32x32xbf16>
    %c0_42 = arith.constant 0 : index
    %c0_43 = arith.constant 0 : index
    %125 = vector.load %arg10[%c0_42, %c0_43] : memref<32x64xbf16, #tpu.memory_space<vmem>>, vector<32x64xbf16>
    %cst_44 = arith.constant dense<0.000000e+00> : vector<32x64xf32>
    %126 = tpu.matmul %124, %125, %cst_44 {dimension_numbers = #tpu.dot_dimension_numbers<[1], [0], [0], [1], [0, 0, 1, 1], [], []>} : vector<32x32xbf16>, vector<32x64xbf16>, vector<32x64xf32> -> vector<32x64xf32>
    %127 = arith.addf %123, %126 : vector<32x64xf32>
    %c0_45 = arith.constant 0 : index
    %c0_46 = arith.constant 0 : index
    %128 = vector.load %arg11[%c0_45, %c0_46] : memref<1x64xf32, #tpu.memory_space<vmem>>, vector<1x64xf32>
    %129 = vector.broadcast %128 : vector<1x64xf32> to vector<32x64xf32>
    %130 = arith.addf %127, %129 : vector<32x64xf32>
    %cst_47 = arith.constant 0.000000e+00 : f32
    %131 = vector.broadcast %cst_47 : f32 to vector<32x64xf32>
    %132 = arith.maximumf %130, %131 : vector<32x64xf32>
    %133 = arith.truncf %132 : vector<32x64xf32> to vector<32x64xbf16>
    %c0_48 = arith.constant 0 : index
    %c0_49 = arith.constant 0 : index
    %134 = vector.load %arg12[%c0_48, %c0_49] : memref<64x32xbf16, #tpu.memory_space<vmem>>, vector<64x32xbf16>
    %cst_50 = arith.constant dense<0.000000e+00> : vector<32x32xf32>
    %135 = tpu.matmul %133, %134, %cst_50 {dimension_numbers = #tpu.dot_dimension_numbers<[1], [0], [0], [1], [0, 0, 1, 1], [], []>} : vector<32x64xbf16>, vector<64x32xbf16>, vector<32x32xf32> -> vector<32x32xf32>
    %c0_51 = arith.constant 0 : index
    %c0_52 = arith.constant 0 : index
    %136 = vector.load %arg13[%c0_51, %c0_52] : memref<1x32xf32, #tpu.memory_space<vmem>>, vector<1x32xf32>
    %137 = vector.broadcast %136 : vector<1x32xf32> to vector<32x32xf32>
    %138 = arith.addf %135, %137 : vector<32x32xf32>
    %139 = arith.addf %2, %138 : vector<32x32xf32>
    %140 = vector.shape_cast %139 : vector<32x32xf32> to vector<2x16x32xf32>
    %c0_53 = arith.constant 0 : index
    %c0_54 = arith.constant 0 : index
    %c0_55 = arith.constant 0 : index
    %141 = vector.load %arg14[%c0_53, %c0_54, %c0_55] : memref<2x16x32xf32, #tpu.memory_space<vmem>>, vector<2x16x32xf32>
    tpu.vector_store %arg14[%c0_53, %c0_54, %c0_55], %140 {strides = array<i32>} : memref<2x16x32xf32, #tpu.memory_space<vmem>>, vector<2x16x32xf32>,
    return
  }
  func.func @transform_0(%arg0: i32) -> (i32, i32, i32) {
    %c0_i32 = arith.constant 0 : i32
    %c0_i32_0 = arith.constant 0 : i32
    %c0_i32_1 = arith.constant 0 : i32
    return %arg0, %c0_i32, %c0_i32_0 : i32, i32, i32
  }
  func.func @transform_1(%arg0: i32) -> (i32, i32, i32) {
    %c0_i32 = arith.constant 0 : i32
    %c0_i32_0 = arith.constant 0 : i32
    %c0_i32_1 = arith.constant 0 : i32
    return %arg0, %c0_i32, %c0_i32_0 : i32, i32, i32
  }
  func.func @transform_2(%arg0: i32) -> (i32, i32) {
    %c0_i32 = arith.constant 0 : i32
    %c0_i32_0 = arith.constant 0 : i32
    %c0_i32_1 = arith.constant 0 : i32
    return %c0_i32, %c0_i32_0 : i32, i32
  }
  func.func @transform_3(%arg0: i32) -> (i32, i32) {
    %c0_i32 = arith.constant 0 : i32
    %c0_i32_0 = arith.constant 0 : i32
    %c0_i32_1 = arith.constant 0 : i32
    return %c0_i32, %c0_i32_0 : i32, i32
  }
  func.func @transform_4(%arg0: i32) -> (i32, i32) {
    %c0_i32 = arith.constant 0 : i32
    %c0_i32_0 = arith.constant 0 : i32
    %c0_i32_1 = arith.constant 0 : i32
    return %c0_i32, %c0_i32_0 : i32, i32
  }
  func.func @transform_5(%arg0: i32) -> (i32, i32) {
    %c0_i32 = arith.constant 0 : i32
    %c0_i32_0 = arith.constant 0 : i32
    %c0_i32_1 = arith.constant 0 : i32
    return %c0_i32, %c0_i32_0 : i32, i32
  }
  func.func @transform_6(%arg0: i32) -> (i32, i32) {
    %c0_i32 = arith.constant 0 : i32
    %c0_i32_0 = arith.constant 0 : i32
    %c0_i32_1 = arith.constant 0 : i32
    return %c0_i32, %c0_i32_0 : i32, i32
  }
  func.func @transform_7(%arg0: i32) -> (i32, i32) {
    %c0_i32 = arith.constant 0 : i32
    %c0_i32_0 = arith.constant 0 : i32
    %c0_i32_1 = arith.constant 0 : i32
    return %c0_i32, %c0_i32_0 : i32, i32
  }
  func.func @transform_8(%arg0: i32) -> (i32, i32) {
    %c0_i32 = arith.constant 0 : i32
    %c0_i32_0 = arith.constant 0 : i32
    %c0_i32_1 = arith.constant 0 : i32
    return %c0_i32, %c0_i32_0 : i32, i32
  }
  func.func @transform_9(%arg0: i32) -> (i32, i32) {
    %c0_i32 = arith.constant 0 : i32
    %c0_i32_0 = arith.constant 0 : i32
    %c0_i32_1 = arith.constant 0 : i32
    return %c0_i32, %c0_i32_0 : i32, i32
  }
  func.func @transform_10(%arg0: i32) -> (i32, i32) {
    %c0_i32 = arith.constant 0 : i32
    %c0_i32_0 = arith.constant 0 : i32
    %c0_i32_1 = arith.constant 0 : i32
    return %c0_i32, %c0_i32_0 : i32, i32
  }
  func.func @transform_11(%arg0: i32) -> (i32, i32) {
    %c0_i32 = arith.constant 0 : i32
    %c0_i32_0 = arith.constant 0 : i32
    %c0_i32_1 = arith.constant 0 : i32
    return %c0_i32, %c0_i32_0 : i32, i32
  }
  func.func @transform_12(%arg0: i32) -> (i32, i32) {
    %c0_i32 = arith.constant 0 : i32
    %c0_i32_0 = arith.constant 0 : i32
    %c0_i32_1 = arith.constant 0 : i32
    return %c0_i32, %c0_i32_0 : i32, i32
  }
  func.func @transform_13(%arg0: i32) -> (i32, i32, i32) {
    %c0_i32 = arith.constant 0 : i32
    %c0_i32_0 = arith.constant 0 : i32
    %c0_i32_1 = arith.constant 0 : i32
    return %arg0, %c0_i32, %c0_i32_0 : i32, i32, i32
  }
}

</mosaic_0001>

<llo_original>
// kernel: gnn_layer_forward.1
$region0: #{gnn_layer_forward.1}
  #allocation0 [shape = 'u32[]', space=smem, size = 0x4, offset = 0x4, fixed_abs, tag = 'smem constant byte address 0x4 - core index']
  #allocation1 [shape = 'u32[144,128]{1,0:T(1,128)}', space=vmem, size = 0x12000, scoped, tag = 'internal scratch']
  %s0 = inlined_call_operand.vmem [shape: f32[4,16,32], index: 0, kind: input, shape index: {}]
  %s1 = inlined_call_operand.vmem [shape: f32[4,16,32], index: 1, kind: input, shape index: {}]
  %s2 = inlined_call_operand.vmem [shape: bf16[32,32], index: 2, kind: input, shape index: {}]
  %s3 = inlined_call_operand.vmem [shape: f32[1,32], index: 3, kind: input, shape index: {}]
  %s4 = inlined_call_operand.vmem [shape: bf16[32,64], index: 4, kind: input, shape index: {}]
  %s5 = inlined_call_operand.vmem [shape: f32[1,64], index: 5, kind: input, shape index: {}]
  %s6 = inlined_call_operand.vmem [shape: bf16[32,32], index: 6, kind: input, shape index: {}]
  %s7 = inlined_call_operand.vmem [shape: f32[1,32], index: 7, kind: input, shape index: {}]
  %s8 = inlined_call_operand.vmem [shape: bf16[32,64], index: 8, kind: input, shape index: {}]
  %s9 = inlined_call_operand.vmem [shape: bf16[32,64], index: 9, kind: input, shape index: {}]
  %s10 = inlined_call_operand.vmem [shape: f32[1,64], index: 10, kind: input, shape index: {}]
  %s11 = inlined_call_operand.vmem [shape: bf16[64,32], index: 11, kind: input, shape index: {}]
  %s12 = inlined_call_operand.vmem [shape: f32[1,32], index: 12, kind: input, shape index: {}]
  %s13 = inlined_call_operand.vmem [shape: f32[4,16,32], index: 13, kind: output, shape index: {}]
  %s14 = sld [smem:[#allocation0]]
  $region85: #{gnn_layer_forward.1} parent=0
    _
  %s16 = ssub.s32 1, %s14
  %s17 = scalar_select 0, %s16, %s14
  loop: start=0, step=1, limit=4
  $region2: #{gnn_layer_forward.1} parent=0 // loop_pre_header
    _
  $region3: #{gnn_layer_forward.1} parent=0 // loop_header
    %s19 = sphi 0, %s23
    %p20 = scmp.ge.s32.totalorder %s19, 4
    %s29 = sphi 0, %s31
    %s32 = sphi 0, %s29
    %s33 = sphi 0, %s32
    %s49 = sphi 0, %s33
    %s55 = sphi 0, %s57
    %s58 = sphi 0, %s55
    %s59 = sphi 0, %s58
    %s75 = sphi 0, %s59
    %s79 = sphi 0, %s79
    %s81 = sphi 0, %s79
    %s82 = sphi 0, %s81
    %s96 = sphi 0, %s82
    %s100 = sphi 0, %s100
    %s102 = sphi 0, %s100
    %s103 = sphi 0, %s102
    %s117 = sphi 0, %s103
    %s121 = sphi 0, %s121
    %s123 = sphi 0, %s121
    %s124 = sphi 0, %s123
    %s138 = sphi 0, %s124
    %s142 = sphi 0, %s142
    %s144 = sphi 0, %s142
    %s145 = sphi 0, %s144
    %s159 = sphi 0, %s145
    %s163 = sphi 0, %s163
    %s165 = sphi 0, %s163
    %s166 = sphi 0, %s165
    %s180 = sphi 0, %s166
    %s184 = sphi 0, %s184
    %s186 = sphi 0, %s184
    %s187 = sphi 0, %s186
    %s201 = sphi 0, %s187
    %s205 = sphi 0, %s205
    %s207 = sphi 0, %s205
    %s208 = sphi 0, %s207
    %s222 = sphi 0, %s208
    %s226 = sphi 0, %s226
    %s228 = sphi 0, %s226
    %s229 = sphi 0, %s228
    %s243 = sphi 0, %s229
    %s247 = sphi 0, %s247
    %s249 = sphi 0, %s247
    %s250 = sphi 0, %s249
    %s264 = sphi 0, %s250
    %s268 = sphi 0, %s268
    %s270 = sphi 0, %s268
    %s271 = sphi 0, %s270
    %s285 = sphi 0, %s271
    %s289 = sphi 0, %s289
    %s291 = sphi 0, %s289
    %s292 = sphi 0, %s291
    %s306 = sphi 0, %s292
    %s312 = sphi 0, %s314
    %s315 = sphi 0, %s312
    %s316 = sphi 0, %s315
    %s332 = sphi 0, %s316
  $region4: #{gnn_layer_forward.1} parent=0 // loop_header_branch
    %22 = sbr.rel (%p20) target = $region8
  $region5: #{gnn_layer_forward.1} parent=0 // loop_body
    %s24 = ssub.s32 %s19, 1
    %s25 = ssub.s32 %s19, 2
    %s26 = sadd.s32 %s19, 1
    %s27 = ssub.s32 %s19, %s26
    %p28 = scmp.eq.s32.totalorder %s27, 0
    %s30 = sadd.s32 %s29, 1
    %s31 = scalar_select %p28, %s29, %s30
    %p34 = pneg %p28
    %p35 = scmp.eq.s32.totalorder %s19, 1
    %p36 = por %p34, %p35
    %p37 = scmp.ne.s32.totalorder %s29, %s32
    %p38 = scmp.eq.s32.totalorder %s19, 0
    %p39 = por %p37, %p38
    %p40 = scmp.ne.s32.totalorder %s29, %s32
    %p41 = scmp.eq.s32.totalorder %s24, 1
    %p42 = por %p40, %p41
    %p43 = scmp.ne.s32.totalorder %s32, %s33
    %p44 = scmp.eq.s32.totalorder %s24, 0
    %p45 = por %p43, %p44
    %p46 = scmp.ne.s32.totalorder %s32, %s33
    %p47 = scmp.eq.s32.totalorder %s25, 1
    %p48 = por %p46, %p47
    %p50 = scmp.ne.s32.totalorder %s33, %s49
    %p51 = scmp.eq.s32.totalorder %s25, 0
    %p52 = por %p50, %p51
    %s53 = ssub.s32 %s19, %s26
    %p54 = scmp.eq.s32.totalorder %s53, 0
    %s56 = sadd.s32 %s55, 1
    %s57 = scalar_select %p54, %s55, %s56
    %p60 = pneg %p54
    %p61 = scmp.eq.s32.totalorder %s19, 1
    %p62 = por %p60, %p61
    %p63 = scmp.ne.s32.totalorder %s55, %s58
    %p64 = scmp.eq.s32.totalorder %s19, 0
    %p65 = por %p63, %p64
    %p66 = scmp.ne.s32.totalorder %s55, %s58
    %p67 = scmp.eq.s32.totalorder %s24, 1
    %p68 = por %p66, %p67
    %p69 = scmp.ne.s32.totalorder %s58, %s59
    %p70 = scmp.eq.s32.totalorder %s24, 0
    %p71 = por %p69, %p70
    %p72 = scmp.ne.s32.totalorder %s58, %s59
    %p73 = scmp.eq.s32.totalorder %s25, 1
    %p74 = por %p72, %p73
    %p76 = scmp.ne.s32.totalorder %s59, %s75
    %p77 = scmp.eq.s32.totalorder %s25, 0
    %p78 = por %p76, %p77
    %s80 = sadd.s32 %s79, 1
    %p83 = scmp.eq.s32.totalorder %s19, 1
    %p84 = scmp.ne.s32.totalorder %s79, %s81
    %p85 = scmp.eq.s32.totalorder %s19, 0
    %p86 = por %p84, %p85
    %p87 = scmp.ne.s32.totalorder %s79, %s81
    %p88 = scmp.eq.s32.totalorder %s24, 1
    %p89 = por %p87, %p88
    %p90 = scmp.ne.s32.totalorder %s81, %s82
    %p91 = scmp.eq.s32.totalorder %s24, 0
    %p92 = por %p90, %p91
    %p93 = scmp.ne.s32.totalorder %s81, %s82
    %p94 = scmp.eq.s32.totalorder %s25, 1
    %p95 = por %p93, %p94
    %p97 = scmp.ne.s32.totalorder %s82, %s96
    %p98 = scmp.eq.s32.totalorder %s25, 0
    %p99 = por %p97, %p98
    %s101 = sadd.s32 %s100, 1
    %p104 = scmp.eq.s32.totalorder %s19, 1
    %p105 = scmp.ne.s32.totalorder %s100, %s102
    %p106 = scmp.eq.s32.totalorder %s19, 0
    %p107 = por %p105, %p106
    %p108 = scmp.ne.s32.totalorder %s100, %s102
    %p109 = scmp.eq.s32.totalorder %s24, 1
    %p110 = por %p108, %p109
    %p111 = scmp.ne.s32.totalorder %s102, %s103
    %p112 = scmp.eq.s32.totalorder %s24, 0
    %p113 = por %p111, %p112
    %p114 = scmp.ne.s32.totalorder %s102, %s103
    %p115 = scmp.eq.s32.totalorder %s25, 1
    %p116 = por %p114, %p115
    %p118 = scmp.ne.s32.totalorder %s103, %s117
    %p119 = scmp.eq.s32.totalorder %s25, 0
    %p120 = por %p118, %p119
    %s122 = sadd.s32 %s121, 1
    %p125 = scmp.eq.s32.totalorder %s19, 1
    %p126 = scmp.ne.s32.totalorder %s121, %s123
    %p127 = scmp.eq.s32.totalorder %s19, 0
    %p128 = por %p126, %p127
    %p129 = scmp.ne.s32.totalorder %s121, %s123
    %p130 = scmp.eq.s32.totalorder %s24, 1
    %p131 = por %p129, %p130
    %p132 = scmp.ne.s32.totalorder %s123, %s124
    %p133 = scmp.eq.s32.totalorder %s24, 0
    %p134 = por %p132, %p133
    %p135 = scmp.ne.s32.totalorder %s123, %s124
    %p136 = scmp.eq.s32.totalorder %s25, 1
    %p137 = por %p135, %p136
    %p139 = scmp.ne.s32.totalorder %s124, %s138
    %p140 = scmp.eq.s32.totalorder %s25, 0
    %p141 = por %p139, %p140
    %s143 = sadd.s32 %s142, 1
    %p146 = scmp.eq.s32.totalorder %s19, 1
    %p147 = scmp.ne.s32.totalorder %s142, %s144
    %p148 = scmp.eq.s32.totalorder %s19, 0
    %p149 = por %p147, %p148
    %p150 = scmp.ne.s32.totalorder %s142, %s144
    %p151 = scmp.eq.s32.totalorder %s24, 1
    %p152 = por %p150, %p151
    %p153 = scmp.ne.s32.totalorder %s144, %s145
    %p154 = scmp.eq.s32.totalorder %s24, 0
    %p155 = por %p153, %p154
    %p156 = scmp.ne.s32.totalorder %s144, %s145
    %p157 = scmp.eq.s32.totalorder %s25, 1
    %p158 = por %p156, %p157
    %p160 = scmp.ne.s32.totalorder %s145, %s159
    %p161 = scmp.eq.s32.totalorder %s25, 0
    %p162 = por %p160, %p161
    %s164 = sadd.s32 %s163, 1
    %p167 = scmp.eq.s32.totalorder %s19, 1
    %p168 = scmp.ne.s32.totalorder %s163, %s165
    %p169 = scmp.eq.s32.totalorder %s19, 0
    %p170 = por %p168, %p169
    %p171 = scmp.ne.s32.totalorder %s163, %s165
    %p172 = scmp.eq.s32.totalorder %s24, 1
    %p173 = por %p171, %p172
    %p174 = scmp.ne.s32.totalorder %s165, %s166
    %p175 = scmp.eq.s32.totalorder %s24, 0
    %p176 = por %p174, %p175
    %p177 = scmp.ne.s32.totalorder %s165, %s166
    %p178 = scmp.eq.s32.totalorder %s25, 1
    %p179 = por %p177, %p178
    %p181 = scmp.ne.s32.totalorder %s166, %s180
    %p182 = scmp.eq.s32.totalorder %s25, 0
    %p183 = por %p181, %p182
    %s185 = sadd.s32 %s184, 1
    %p188 = scmp.eq.s32.totalorder %s19, 1
    %p189 = scmp.ne.s32.totalorder %s184, %s186
    %p190 = scmp.eq.s32.totalorder %s19, 0
    %p191 = por %p189, %p190
    %p192 = scmp.ne.s32.totalorder %s184, %s186
    %p193 = scmp.eq.s32.totalorder %s24, 1
    %p194 = por %p192, %p193
    %p195 = scmp.ne.s32.totalorder %s186, %s187
    %p196 = scmp.eq.s32.totalorder %s24, 0
    %p197 = por %p195, %p196
    %p198 = scmp.ne.s32.totalorder %s186, %s187
    %p199 = scmp.eq.s32.totalorder %s25, 1
    %p200 = por %p198, %p199
    %p202 = scmp.ne.s32.totalorder %s187, %s201
    %p203 = scmp.eq.s32.totalorder %s25, 0
    %p204 = por %p202, %p203
    %s206 = sadd.s32 %s205, 1
    %p209 = scmp.eq.s32.totalorder %s19, 1
    %p210 = scmp.ne.s32.totalorder %s205, %s207
    %p211 = scmp.eq.s32.totalorder %s19, 0
    %p212 = por %p210, %p211
    %p213 = scmp.ne.s32.totalorder %s205, %s207
    %p214 = scmp.eq.s32.totalorder %s24, 1
    %p215 = por %p213, %p214
    %p216 = scmp.ne.s32.totalorder %s207, %s208
    %p217 = scmp.eq.s32.totalorder %s24, 0
    %p218 = por %p216, %p217
    %p219 = scmp.ne.s32.totalorder %s207, %s208
    %p220 = scmp.eq.s32.totalorder %s25, 1
    %p221 = por %p219, %p220
    %p223 = scmp.ne.s32.totalorder %s208, %s222
    %p224 = scmp.eq.s32.totalorder %s25, 0
    %p225 = por %p223, %p224
    %s227 = sadd.s32 %s226, 1
    %p230 = scmp.eq.s32.totalorder %s19, 1
    %p231 = scmp.ne.s32.totalorder %s226, %s228
    %p232 = scmp.eq.s32.totalorder %s19, 0
    %p233 = por %p231, %p232
    %p234 = scmp.ne.s32.totalorder %s226, %s228
    %p235 = scmp.eq.s32.totalorder %s24, 1
    %p236 = por %p234, %p235
    %p237 = scmp.ne.s32.totalorder %s228, %s229
    %p238 = scmp.eq.s32.totalorder %s24, 0
    %p239 = por %p237, %p238
    %p240 = scmp.ne.s32.totalorder %s228, %s229
    %p241 = scmp.eq.s32.totalorder %s25, 1
    %p242 = por %p240, %p241
    %p244 = scmp.ne.s32.totalorder %s229, %s243
    %p245 = scmp.eq.s32.totalorder %s25, 0
    %p246 = por %p244, %p245
    %s248 = sadd.s32 %s247, 1
    %p251 = scmp.eq.s32.totalorder %s19, 1
    %p252 = scmp.ne.s32.totalorder %s247, %s249
    %p253 = scmp.eq.s32.totalorder %s19, 0
    %p254 = por %p252, %p253
    %p255 = scmp.ne.s32.totalorder %s247, %s249
    %p256 = scmp.eq.s32.totalorder %s24, 1
    %p257 = por %p255, %p256
    %p258 = scmp.ne.s32.totalorder %s249, %s250
    %p259 = scmp.eq.s32.totalorder %s24, 0
    %p260 = por %p258, %p259
    %p261 = scmp.ne.s32.totalorder %s249, %s250
    %p262 = scmp.eq.s32.totalorder %s25, 1
    %p263 = por %p261, %p262
    %p265 = scmp.ne.s32.totalorder %s250, %s264
    %p266 = scmp.eq.s32.totalorder %s25, 0
    %p267 = por %p265, %p266
    %s269 = sadd.s32 %s268, 1
    %p272 = scmp.eq.s32.totalorder %s19, 1
    %p273 = scmp.ne.s32.totalorder %s268, %s270
    %p274 = scmp.eq.s32.totalorder %s19, 0
    %p275 = por %p273, %p274
    %p276 = scmp.ne.s32.totalorder %s268, %s270
    %p277 = scmp.eq.s32.totalorder %s24, 1
    %p278 = por %p276, %p277
    %p279 = scmp.ne.s32.totalorder %s270, %s271
    %p280 = scmp.eq.s32.totalorder %s24, 0
    %p281 = por %p279, %p280
    %p282 = scmp.ne.s32.totalorder %s270, %s271
    %p283 = scmp.eq.s32.totalorder %s25, 1
    %p284 = por %p282, %p283
    %p286 = scmp.ne.s32.totalorder %s271, %s285
    %p287 = scmp.eq.s32.totalorder %s25, 0
    %p288 = por %p286, %p287
    %s290 = sadd.s32 %s289, 1
    %p293 = scmp.eq.s32.totalorder %s19, 1
    %p294 = scmp.ne.s32.totalorder %s289, %s291
    %p295 = scmp.eq.s32.totalorder %s19, 0
    %p296 = por %p294, %p295
    %p297 = scmp.ne.s32.totalorder %s289, %s291
    %p298 = scmp.eq.s32.totalorder %s24, 1
    %p299 = por %p297, %p298
    %p300 = scmp.ne.s32.totalorder %s291, %s292
    %p301 = scmp.eq.s32.totalorder %s24, 0
    %p302 = por %p300, %p301
    %p303 = scmp.ne.s32.totalorder %s291, %s292
    %p304 = scmp.eq.s32.totalorder %s25, 1
    %p305 = por %p303, %p304
    %p307 = scmp.ne.s32.totalorder %s292, %s306
    %p308 = scmp.eq.s32.totalorder %s25, 0
    %p309 = por %p307, %p308
    %s310 = ssub.s32 %s19, %s26
    %p311 = scmp.eq.s32.totalorder %s310, 0
    %s313 = sadd.s32 %s312, 1
    %s314 = scalar_select %p311, %s312, %s313
    %p317 = pneg %p311
    %p318 = scmp.eq.s32.totalorder %s19, 1
    %p319 = por %p317, %p318
    %p320 = scmp.ne.s32.totalorder %s312, %s315
    %p321 = scmp.eq.s32.totalorder %s19, 0
    %p322 = por %p320, %p321
    %p323 = scmp.ne.s32.totalorder %s312, %s315
    %p324 = scmp.eq.s32.totalorder %s24, 1
    %p325 = por %p323, %p324
    %p326 = scmp.ne.s32.totalorder %s315, %s316
    %p327 = scmp.eq.s32.totalorder %s24, 0
    %p328 = por %p326, %p327
    %p329 = scmp.ne.s32.totalorder %s315, %s316
    %p330 = scmp.eq.s32.totalorder %s25, 1
    %p331 = por %p329, %p330
    %p333 = scmp.ne.s32.totalorder %s316, %s332
    %p334 = scmp.eq.s32.totalorder %s25, 0
    %p335 = por %p333, %p334
    %p336 = scmp.le.s32.totalorder 1, %s19
    %p337 = scmp.lt.s32.totalorder %s19, 3
    %p338 = pnand %p336, %p337
    %p339 = pneg %p338
    // Predicated region
    $region9: #{gnn_layer_forward.1} parent=5 // pred_check
      _
    $region10: #{gnn_layer_forward.1} parent=5 // pred_check_branch
      %341 = sbr.rel (%p338) target = $region12
    $region11: #{gnn_layer_forward.1} parent=5 // pred_region
      %s342 = ssub.s32 %s19, 1
      // Predicated region
      $region13: #{gnn_layer_forward.1} parent=11 // pred_check
        %p343 = pneg %p92
      $region14: #{gnn_layer_forward.1} parent=11 // pred_check_branch
        %345 = sbr.rel (%p343) target = $region16
      $region15: #{gnn_layer_forward.1} parent=11 // pred_region
        _
      $region16: #{gnn_layer_forward.1} parent=11 // pred_fallthru
        _
      // Predicated region
      $region17: #{gnn_layer_forward.1} parent=11 // pred_check
        %p346 = pneg %p113
      $region18: #{gnn_layer_forward.1} parent=11 // pred_check_branch
        %348 = sbr.rel (%p346) target = $region20
      $region19: #{gnn_layer_forward.1} parent=11 // pred_region
        _
      $region20: #{gnn_layer_forward.1} parent=11 // pred_fallthru
        _
      // Predicated region
      $region21: #{gnn_layer_forward.1} parent=11 // pred_check
        %p349 = pneg %p134
      $region22: #{gnn_layer_forward.1} parent=11 // pred_check_branch
        %351 = sbr.rel (%p349) target = $region24
      $region23: #{gnn_layer_forward.1} parent=11 // pred_region
        _
      $region24: #{gnn_layer_forward.1} parent=11 // pred_fallthru
        _
      // Predicated region
      $region25: #{gnn_layer_forward.1} parent=11 // pred_check
        %p352 = pneg %p155
      $region26: #{gnn_layer_forward.1} parent=11 // pred_check_branch
        %354 = sbr.rel (%p352) target = $region28
      $region27: #{gnn_layer_forward.1} parent=11 // pred_region
        _
      $region28: #{gnn_layer_forward.1} parent=11 // pred_fallthru
        _
      // Predicated region
      $region29: #{gnn_layer_forward.1} parent=11 // pred_check
        %p355 = pneg %p176
      $region30: #{gnn_layer_forward.1} parent=11 // pred_check_branch
        %357 = sbr.rel (%p355) target = $region32
      $region31: #{gnn_layer_forward.1} parent=11 // pred_region
        _
      $region32: #{gnn_layer_forward.1} parent=11 // pred_fallthru
        _
      // Predicated region
      $region33: #{gnn_layer_forward.1} parent=11 // pred_check
        %p358 = pneg %p197
      $region34: #{gnn_layer_forward.1} parent=11 // pred_check_branch
        %360 = sbr.rel (%p358) target = $region36
      $region35: #{gnn_layer_forward.1} parent=11 // pred_region
        _
      $region36: #{gnn_layer_forward.1} parent=11 // pred_fallthru
        _
      // Predicated region
      $region37: #{gnn_layer_forward.1} parent=11 // pred_check
        %p361 = pneg %p218
      $region38: #{gnn_layer_forward.1} parent=11 // pred_check_branch
        %363 = sbr.rel (%p361) target = $region40
      $region39: #{gnn_layer_forward.1} parent=11 // pred_region
        _
      $region40: #{gnn_layer_forward.1} parent=11 // pred_fallthru
        _
      // Predicated region
      $region41: #{gnn_layer_forward.1} parent=11 // pred_check
        %p364 = pneg %p239
      $region42: #{gnn_layer_forward.1} parent=11 // pred_check_branch
        %366 = sbr.rel (%p364) target = $region44
      $region43: #{gnn_layer_forward.1} parent=11 // pred_region
        _
      $region44: #{gnn_layer_forward.1} parent=11 // pred_fallthru
        _
      // Predicated region
      $region45: #{gnn_layer_forward.1} parent=11 // pred_check
        %p367 = pneg %p260
      $region46: #{gnn_layer_forward.1} parent=11 // pred_check_branch
        %369 = sbr.rel (%p367) target = $region48
      $region47: #{gnn_layer_forward.1} parent=11 // pred_region
        _
      $region48: #{gnn_layer_forward.1} parent=11 // pred_fallthru
        _
      // Predicated region
      $region49: #{gnn_layer_forward.1} parent=11 // pred_check
        %p370 = pneg %p281
      $region50: #{gnn_layer_forward.1} parent=11 // pred_check_branch
        %372 = sbr.rel (%p370) target = $region52
      $region51: #{gnn_layer_forward.1} parent=11 // pred_region
        _
      $region52: #{gnn_layer_forward.1} parent=11 // pred_fallthru
        _
      // Predicated region
      $region53: #{gnn_layer_forward.1} parent=11 // pred_check
        %p373 = pneg %p302
      $region54: #{gnn_layer_forward.1} parent=11 // pred_check_branch
        %375 = sbr.rel (%p373) target = $region56
      $region55: #{gnn_layer_forward.1} parent=11 // pred_region
        _
      $region56: #{gnn_layer_forward.1} parent=11 // pred_fallthru
        _
    $region12: #{gnn_layer_forward.1} parent=5 // pred_fallthru
      _
    %p376 = scmp.lt.s32.totalorder %s19, 2
    // Predicated region
    $region57: #{gnn_layer_forward.1} parent=5 // pred_check
      %p377 = pneg %p376
    $region58: #{gnn_layer_forward.1} parent=5 // pred_check_branch
      %379 = sbr.rel (%p377) target = $region60
    $region59: #{gnn_layer_forward.1} parent=5 // pred_region
      // Predicated region
      $region61: #{gnn_layer_forward.1} parent=59 // pred_check
        %p380 = pneg %p39
      $region62: #{gnn_layer_forward.1} parent=59 // pred_check_branch
        %382 = sbr.rel (%p380) target = $region64
      $region63: #{gnn_layer_forward.1} parent=59 // pred_region
        %s383 = smul.u32 2, %s19
        %p384 = scmp.lt.s32.totalorder %s383, 3
        %s385 = scalar_select %p384, %s383, 3
        %s386 = smul.addr %s385, 2
        %s387 = smul.addr %s386, 8
        %s388 = scalar_lea.vmem %s0, %s387
        %s389 = smul.u32 2, %s19
      $region64: #{gnn_layer_forward.1} parent=59 // pred_fallthru
        _
      // Predicated region
      $region65: #{gnn_layer_forward.1} parent=59 // pred_check
        %p390 = pneg %p65
      $region66: #{gnn_layer_forward.1} parent=59 // pred_check_branch
        %392 = sbr.rel (%p390) target = $region68
      $region67: #{gnn_layer_forward.1} parent=59 // pred_region
        %s393 = smul.u32 2, %s19
        %p394 = scmp.lt.s32.totalorder %s393, 3
        %s395 = scalar_select %p394, %s393, 3
        %s396 = smul.addr %s395, 2
        %s397 = smul.addr %s396, 8
        %s398 = scalar_lea.vmem %s1, %s397
        %s399 = smul.u32 2, %s19
      $region68: #{gnn_layer_forward.1} parent=59 // pred_fallthru
        _
    $region60: #{gnn_layer_forward.1} parent=5 // pred_fallthru
      _
    %p400 = scmp.le.s32.totalorder 1, %s19
    %p401 = scmp.lt.s32.totalorder %s19, 3
    %p402 = pnand %p400, %p401
    %p403 = pneg %p402
    // Predicated region
    $region69: #{gnn_layer_forward.1} parent=5 // pred_check
      _
    $region70: #{gnn_layer_forward.1} parent=5 // pred_check_branch
      %405 = sbr.rel (%p402) target = $region72
    $region71: #{gnn_layer_forward.1} parent=5 // pred_region
      %s406 = ssub.s32 %s19, 1
      %s407 = smul.u32 2, %s24
      %p408 = scmp.lt.s32.totalorder %s407, 3
      %s409 = scalar_select %p408, %s407, 3
      %s410 = smul.addr %s409, 2
      %s411 = smul.addr %s410, 8
      %s412 = scalar_lea.vmem %s0, %s411
      %p413 = pneg %p45
      %p414 = pneg %p42
      %s415 = smul.u32 2, %s24
      %p416 = scmp.lt.s32.totalorder %s415, 3
      %s417 = scalar_select %p416, %s415, 3
      %s418 = smul.addr %s417, 2
      %s419 = smul.addr %s418, 8
      %s420 = scalar_lea.vmem %s1, %s419
      %p421 = pneg %p71
      %p422 = pneg %p68
      %p423 = pneg %p92
      %p424 = pneg %p89
      %p425 = pneg %p113
      %p426 = pneg %p110
      %p427 = pneg %p134
      %p428 = pneg %p131
      %p429 = pneg %p155
      %p430 = pneg %p152
      %p431 = pneg %p176
      %p432 = pneg %p173
      %p433 = pneg %p197
      %p434 = pneg %p194
      %p435 = pneg %p218
      %p436 = pneg %p215
      %p437 = pneg %p239
      %p438 = pneg %p236
      %p439 = pneg %p260
      %p440 = pneg %p257
      %p441 = pneg %p281
      %p442 = pneg %p278
      %p443 = pneg %p302
      %p444 = pneg %p299
      %p445 = pneg %p328
      %p446 = pneg %p325
      %s447 = smul.u32 2, %s24
      %p448 = scmp.lt.s32.totalorder %s447, 3
      %s449 = scalar_select %p448, %s447, 3
      %s450 = smul.addr %s449, 2
      %s451 = smul.addr %s450, 8
      %s452 = scalar_lea.vmem %s13, %s451
      %s453 = smul.u32 2, %s24
      %p454 = scmp.lt.s32.totalorder %s453, 3
      %s455 = scalar_select %p454, %s453, 3
      %s456 = smul.addr %s455, 2
      %s457 = smul.addr %s456, 8
      %s458 = scalar_lea.vmem %s0, %s457
      %s459 = smul.u32 2, %s24
      %s460 = smul.u32 2, %s24
      %p461 = scmp.lt.s32.totalorder %s460, 3
      %s462 = scalar_select %p461, %s460, 3
      %s463 = smul.addr %s462, 2
      %s464 = smul.addr %s463, 8
      %s465 = scalar_lea.vmem %s1, %s464
      %s466 = smul.u32 2, %s24
      %s467 = smul.u32 2, %s24
      %p468 = scmp.lt.s32.totalorder %s467, 3
      %s469 = scalar_select %p468, %s467, 3
      %s470 = smul.addr %s469, 2
      %s471 = smul.addr %s470, 8
      %s472 = scalar_lea.vmem %s13, %s471
      %s473 = smul.u32 2, %s24
      %v475 = vld [vmem:[%s458] sm:$0xff]
      %v476 = vld [vmem:[%s458 + $0x8] sm:$0xff]
      %v477 = vld [vmem:[%s458 + $0x10] sm:$0xff]
      %v478 = vld [vmem:[%s458 + $0x18] sm:$0xff]
      %v479 = vld [vmem:[%s465] sm:$0xff]
      %v480 = vld [vmem:[%s465 + $0x8] sm:$0xff]
      %v481 = vld [vmem:[%s465 + $0x10] sm:$0xff]
      %v482 = vld [vmem:[%s465 + $0x18] sm:$0xff]
      %v483 = vpack.c.bf16 %v476, %v475
      %v484 = vpack.c.bf16 %v478, %v477
      %v485 = vpack.c.bf16 %v480, %v479
      %v486 = vpack.c.bf16 %v482, %v481
      %v487 = vld [vmem:[%s2] sm:$0xf]
      %v488 = vld [vmem:[%s2 + $0x4] sm:$0xf]
      %v489 = vld [vmem:[%s2 + $0x8] sm:$0xf]
      %v490 = vld [vmem:[%s2 + $0xc] sm:$0xf]
      %v491 = vld [vmem:[%s3] sm:$0x1]
      %v493 = vlaneseq
      %v494 = vshrl.u32 %v493, 7
      %v495 = vsub.s32 0, %v494
      %v496 = vrot.slane %v491, %v495
      %v502 = vunpack.c.l.b16 %v487
      %v503 = vunpack.c.l.b16 %v488
      %v504 = vunpack.c.l.b16 %v489
      %v505 = vunpack.c.l.b16 %v490
      %v506 = vpack.c.b16 %v503, %v502
      %v507 = vpack.c.b16 %v505, %v504
      %vm510 = vcmask 261120
      %v512 = vsel %vm510, %v483, 0
      %v515 = vsel %vm510, %v484, 0
      %517 = vmatprep.subr.bf16.mxu0 0
      %518 = vmatpush1.bf16.msra.mxu0 0
      %519 = vmatprep.subr.bf16.mxu0 0
      %520 = vmatpush1.bf16.msra.mxu0 0
      %521 = vmatprep.subr.bf16.mxu0 0
      %522 = vmatpush1.bf16.msra.mxu0 0
      %523 = vmatprep.subr.bf16.mxu0 0
      %524 = vmatpush1.bf16.msra.mxu0 0
      %525 = vmatprep.subr.bf16.mxu0 0
      %526 = vmatpush1.bf16.msra.mxu0 0
      %527 = vmatprep.subr.bf16.mxu0 0
      %528 = vmatpush1.bf16.msra.mxu0 0
      %529 = vmatprep.subr.bf16.mxu0 0
      %530 = vmatpush1.bf16.msra.mxu0 %v507
      %531 = vmatprep.subr.bf16.mxu0 0
      %532 = vmatpush1.bf16.msra.mxu0 %v506
      %533 = vmatprep.subr.bf16.mxu0 0
      %534 = vmatpush2.bf16.msra.mxu0 0
      %535 = vmatprep.subr.bf16.mxu0 0
      %536 = vmatpush2.bf16.msra.mxu0 0
      %537 = vmatprep.subr.bf16.mxu0 0
      %538 = vmatpush2.bf16.msra.mxu0 0
      %539 = vmatprep.subr.bf16.mxu0 0
      %540 = vmatpush2.bf16.msra.mxu0 0
      %541 = vmatprep.subr.bf16.mxu0 0
      %542 = vmatpush2.bf16.msra.mxu0 0
      %543 = vmatprep.subr.bf16.mxu0 0
      %544 = vmatpush2.bf16.msra.mxu0 0
      %545 = vmatprep.subr.bf16.mxu0 0
      %546 = vmatpush2.bf16.msra.mxu0 0
      %547 = vmatprep.subr.bf16.mxu0 0
      %548 = vmatpush2.bf16.msra.mxu0 0
      %549 = vmatprep.mubr.bf16.mxu0 0
      %550 = vmatmul.mubr.bf16.gmra.mxu0 %v512
      %v551 = vpop.f32.mrf.mxu0
      %v552 = vadd.f32 %v496, %v551
      %v553 = vpop.f32.mrf.mxu0
      %v554 = vpop.f32.mrf.mxu0
      %v555 = vadd.f32 %v496, %v554
      %v556 = vpop.f32.mrf.mxu0
      %557 = vmatprep.mubr.bf16.mxu0 0
      %558 = vmatmul.mubr.bf16.gmra.mxu0 %v515
      %v559 = vpop.f32.mrf.mxu0
      %v560 = vadd.f32 %v496, %v559
      %v561 = vpop.f32.mrf.mxu0
      %v562 = vpop.f32.mrf.mxu0
      %v563 = vadd.f32 %v496, %v562
      %v564 = vpop.f32.mrf.mxu0
      %565 = vdwg.mxu0
      %v566 = vld [vmem:[%s4] sm:$0xf]
      %v567 = vld [vmem:[%s4 + $0x4] sm:$0xf]
      %v568 = vld [vmem:[%s4 + $0x8] sm:$0xf]
      %v569 = vld [vmem:[%s4 + $0xc] sm:$0xf]
      %v570 = vld [vmem:[%s5] sm:$0x1]
      %v572 = vlaneseq
      %v573 = vshrl.u32 %v572, 7
      %v574 = vsub.s32 0, %v573
      %v575 = vrot.slane %v570, %v574
      %v581 = vunpack.c.l.b16 %v566
      %v582 = vunpack.c.l.b16 %v567
      %v583 = vunpack.c.l.b16 %v568
      %v584 = vunpack.c.l.b16 %v569
      %v585 = vpack.c.b16 %v582, %v581
      %v586 = vpack.c.b16 %v584, %v583
      %v590 = vsel %vm510, %v485, 0
      %v593 = vsel %vm510, %v486, 0
      %595 = vmatprep.subr.bf16.mxu0 0
      %596 = vmatpush1.bf16.msra.mxu0 0
      %597 = vmatprep.subr.bf16.mxu0 0
      %598 = vmatpush1.bf16.msra.mxu0 0
      %599 = vmatprep.subr.bf16.mxu0 0
      %600 = vmatpush1.bf16.msra.mxu0 0
      %601 = vmatprep.subr.bf16.mxu0 0
      %602 = vmatpush1.bf16.msra.mxu0 0
      %603 = vmatprep.subr.bf16.mxu0 0
      %604 = vmatpush1.bf16.msra.mxu0 0
      %605 = vmatprep.subr.bf16.mxu0 0
      %606 = vmatpush1.bf16.msra.mxu0 0
      %607 = vmatprep.subr.bf16.mxu0 0
      %608 = vmatpush1.bf16.msra.mxu0 %v586
      %609 = vmatprep.subr.bf16.mxu0 0
      %610 = vmatpush1.bf16.msra.mxu0 %v585
      %611 = vmatprep.subr.bf16.mxu0 0
      %612 = vmatpush2.bf16.msra.mxu0 0
      %613 = vmatprep.subr.bf16.mxu0 0
      %614 = vmatpush2.bf16.msra.mxu0 0
      %615 = vmatprep.subr.bf16.mxu0 0
      %616 = vmatpush2.bf16.msra.mxu0 0
      %617 = vmatprep.subr.bf16.mxu0 0
      %618 = vmatpush2.bf16.msra.mxu0 0
      %619 = vmatprep.subr.bf16.mxu0 0
      %620 = vmatpush2.bf16.msra.mxu0 0
      %621 = vmatprep.subr.bf16.mxu0 0
      %622 = vmatpush2.bf16.msra.mxu0 0
      %623 = vmatprep.subr.bf16.mxu0 0
      %624 = vmatpush2.bf16.msra.mxu0 0
      %625 = vmatprep.subr.bf16.mxu0 0
      %626 = vmatpush2.bf16.msra.mxu0 0
      %627 = vmatprep.mubr.bf16.mxu0 0
      %628 = vmatmul.mubr.bf16.gmra.mxu0 %v590
      %v629 = vpop.f32.mrf.mxu0
      %v630 = vadd.f32 %v575, %v629
      %v631 = vpop.f32.mrf.mxu0
      %v632 = vpop.f32.mrf.mxu0
      %v633 = vadd.f32 %v575, %v632
      %v634 = vpop.f32.mrf.mxu0
      %635 = vmatprep.mubr.bf16.mxu0 0
      %636 = vmatmul.mubr.bf16.gmra.mxu0 %v593
      %v637 = vpop.f32.mrf.mxu0
      %v638 = vadd.f32 %v575, %v637
      %v639 = vpop.f32.mrf.mxu0
      %v640 = vpop.f32.mrf.mxu0
      %v641 = vadd.f32 %v575, %v640
      %v642 = vpop.f32.mrf.mxu0
      %643 = vdwg.mxu0
      %v644 = vld [vmem:[%s6] sm:$0xf]
      %v645 = vld [vmem:[%s6 + $0x4] sm:$0xf]
      %v646 = vld [vmem:[%s6 + $0x8] sm:$0xf]
      %v647 = vld [vmem:[%s6 + $0xc] sm:$0xf]
      %v648 = vld [vmem:[%s7] sm:$0x1]
      %v650 = vlaneseq
      %v651 = vshrl.u32 %v650, 7
      %v652 = vsub.s32 0, %v651
      %v653 = vrot.slane %v648, %v652
      %v655 = vadd.f32 %v653, 0.0
      %v656 = vpack.c.bf16 %v555, %v552
      %v657 = vpack.c.bf16 %v563, %v560
      %v658 = vpack.c.bf16 %v633, %v630
      %v659 = vpack.c.bf16 %v641, %v638
      %vm660 = vcmask 64512
      %v662 = vsel %vm660, %v656, 0
      %v665 = vsel %vm660, %v658, 0
      %667 = vmatprep.subr.bf16.mxu0 0
      %668 = vmatpush1.bf16.xpose.msra.mxu0 0
      %669 = vmatprep.subr.bf16.mxu0 0
      %670 = vmatpush1.bf16.xpose.msra.mxu0 0
      %671 = vmatprep.subr.bf16.mxu0 0
      %672 = vmatpush1.bf16.xpose.msra.mxu0 0
      %673 = vmatprep.subr.bf16.mxu0 0
      %674 = vmatpush1.bf16.xpose.msra.mxu0 0
      %675 = vmatprep.subr.bf16.mxu0 0
      %676 = vmatpush1.bf16.xpose.msra.mxu0 0
      %677 = vmatprep.subr.bf16.mxu0 0
      %678 = vmatpush1.bf16.xpose.msra.mxu0 0
      %679 = vmatprep.subr.bf16.mxu0 0
      %680 = vmatpush1.bf16.xpose.msra.mxu0 0
      %681 = vmatprep.subr.bf16.mxu0 0
      %682 = vmatpush1.bf16.xpose.msra.mxu0 %v665
      %683 = vmatprep.subr.bf16.mxu0 0
      %684 = vmatpush2.bf16.xpose.msra.mxu0 0
      %685 = vmatprep.subr.bf16.mxu0 0
      %686 = vmatpush2.bf16.xpose.msra.mxu0 0
      %687 = vmatprep.subr.bf16.mxu0 0
      %688 = vmatpush2.bf16.xpose.msra.mxu0 0
      %689 = vmatprep.subr.bf16.mxu0 0
      %690 = vmatpush2.bf16.xpose.msra.mxu0 0
      %691 = vmatprep.subr.bf16.mxu0 0
      %692 = vmatpush2.bf16.xpose.msra.mxu0 0
      %693 = vmatprep.subr.bf16.mxu0 0
      %694 = vmatpush2.bf16.xpose.msra.mxu0 0
      %695 = vmatprep.subr.bf16.mxu0 0
      %696 = vmatpush2.bf16.xpose.msra.mxu0 0
      %697 = vmatprep.subr.bf16.mxu0 0
      %698 = vmatpush2.bf16.xpose.msra.mxu0 0
      %699 = vmatprep.mubr.bf16.mxu0 0
      %700 = vmatmul.mubr.bf16.gmra.mxu0 %v662
      %v701 = vpop.f32.mrf.mxu0
      %v702 = vadd.f32 0.0, %v701
      %v703 = vpop.f32.mrf.mxu0
      %v704 = vpop.f32.mrf.mxu0
      %v705 = vadd.f32 0.0, %v704
      %v706 = vpop.f32.mrf.mxu0
      %707 = vdwg.mxu0
      %v709 = vsel %vm660, %v657, 0
      %v712 = vsel %vm660, %v659, 0
      %714 = vmatprep.subr.bf16.mxu0 0
      %715 = vmatpush1.bf16.xpose.msra.mxu0 0
      %716 = vmatprep.subr.bf16.mxu0 0
      %717 = vmatpush1.bf16.xpose.msra.mxu0 0
      %718 = vmatprep.subr.bf16.mxu0 0
      %719 = vmatpush1.bf16.xpose.msra.mxu0 0
      %720 = vmatprep.subr.bf16.mxu0 0
      %721 = vmatpush1.bf16.xpose.msra.mxu0 0
      %722 = vmatprep.subr.bf16.mxu0 0
      %723 = vmatpush1.bf16.xpose.msra.mxu0 0
      %724 = vmatprep.subr.bf16.mxu0 0
      %725 = vmatpush1.bf16.xpose.msra.mxu0 0
      %726 = vmatprep.subr.bf16.mxu0 0
      %727 = vmatpush1.bf16.xpose.msra.mxu0 0
      %728 = vmatprep.subr.bf16.mxu0 0
      %729 = vmatpush1.bf16.xpose.msra.mxu0 %v712
      %730 = vmatprep.subr.bf16.mxu0 0
      %731 = vmatpush2.bf16.xpose.msra.mxu0 0
      %732 = vmatprep.subr.bf16.mxu0 0
      %733 = vmatpush2.bf16.xpose.msra.mxu0 0
      %734 = vmatprep.subr.bf16.mxu0 0
      %735 = vmatpush2.bf16.xpose.msra.mxu0 0
      %736 = vmatprep.subr.bf16.mxu0 0
      %737 = vmatpush2.bf16.xpose.msra.mxu0 0
      %738 = vmatprep.subr.bf16.mxu0 0
      %739 = vmatpush2.bf16.xpose.msra.mxu0 0
      %740 = vmatprep.subr.bf16.mxu0 0
      %741 = vmatpush2.bf16.xpose.msra.mxu0 0
      %742 = vmatprep.subr.bf16.mxu0 0
      %743 = vmatpush2.bf16.xpose.msra.mxu0 0
      %744 = vmatprep.subr.bf16.mxu0 0
      %745 = vmatpush2.bf16.xpose.msra.mxu0 0
      %746 = vmatprep.mubr.bf16.mxu0 0
      %747 = vmatmul.mubr.bf16.gmra.mxu0 %v709
      %v748 = vpop.f32.mrf.mxu0
      %v749 = vadd.f32 0.0, %v748
      %v750 = vpop.f32.mrf.mxu0
      %v751 = vpop.f32.mrf.mxu0
      %v752 = vadd.f32 0.0, %v751
      %v753 = vpop.f32.mrf.mxu0
      %754 = vdwg.mxu0
      %vm755 = vcmask 130048
      %v756 = vsel %vm755, %v702, -inf
      %757 = vmax.xlane.f32.xlu0 %v756
      %v758 = vpop.xlane.xlu0 %757
      %v759 = vsel %vm755, %v705, -inf
      %760 = vmax.xlane.f32.xlu0 %v759
      %v761 = vpop.xlane.xlu0 %760
      %v762 = vsel %vm755, %v749, -inf
      %763 = vmax.xlane.f32.xlu0 %v762
      %v764 = vpop.xlane.xlu0 %763
      %v765 = vsel %vm755, %v752, -inf
      %766 = vmax.xlane.f32.xlu0 %v765
      %v767 = vpop.xlane.xlu0 %766
      %v768 = vsub.f32 %v702, %v758
      %v769 = vsub.f32 %v705, %v761
      %v770 = vsub.f32 %v749, %v764
      %v771 = vsub.f32 %v752, %v767
      %v772 = vmul.f32 %v768, 1.442695
      %v773 = vpow.pop %v772
      %v774 = vmul.f32 %v769, 1.442695
      %v775 = vpow.pop %v774
      %v776 = vmul.f32 %v770, 1.442695
      %v777 = vpow.pop %v776
      %v778 = vmul.f32 %v771, 1.442695
      %v779 = vpow.pop %v778
      %v780 = vsel %vm755, %v773, 0.0
      %781 = vadd.xlane.f32.xlu0 %v780
      %v782 = vpop.xlane.xlu0 %781
      %v783 = vsel %vm755, %v775, 0.0
      %784 = vadd.xlane.f32.xlu0 %v783
      %v785 = vpop.xlane.xlu0 %784
      %v786 = vsel %vm755, %v777, 0.0
      %787 = vadd.xlane.f32.xlu0 %v786
      %v788 = vpop.xlane.xlu0 %787
      %v789 = vsel %vm755, %v779, 0.0
      %790 = vadd.xlane.f32.xlu0 %v789
      %v791 = vpop.xlane.xlu0 %790
      %v792 = vrcp.pop %v782
      %v793 = vrcp.pop %v785
      %v794 = vrcp.pop %v788
      %v795 = vrcp.pop %v791
      %v796 = vmul.f32 %v773, %v792
      %v797 = vmul.f32 %v775, %v793
      %v798 = vmul.f32 %v777, %v794
      %v799 = vmul.f32 %v779, %v795
      %v800 = vpack.c.bf16 %v797, %v796
      %v801 = vpack.c.bf16 %v799, %v798
      %803 = vrot.lane.b32.xlu0 %v658, 96
      %v804 = vpop.permute.xlu0 %803
      %v807 = vsel %vm755, %v800, 0
      %809 = vmatprep.subr.bf16.mxu0 0
      %810 = vmatpush1.bf16.msra.mxu0 0
      %811 = vmatprep.subr.bf16.mxu0 0
      %812 = vmatpush1.bf16.msra.mxu0 0
      %813 = vmatprep.subr.bf16.mxu0 0
      %814 = vmatpush1.bf16.msra.mxu0 0
      %815 = vmatprep.subr.bf16.mxu0 0
      %816 = vmatpush1.bf16.msra.mxu0 0
      %817 = vmatprep.subr.bf16.mxu0 0
      %818 = vmatpush1.bf16.msra.mxu0 0
      %819 = vmatprep.subr.bf16.mxu0 0
      %820 = vmatpush1.bf16.msra.mxu0 0
      %821 = vmatprep.subr.bf16.mxu0 0
      %822 = vmatpush1.bf16.msra.mxu0 0
      %823 = vmatprep.subr.bf16.mxu0 0
      %824 = vmatpush1.bf16.msra.mxu0 %v804
      %825 = vmatprep.subr.bf16.mxu0 0
      %826 = vmatpush2.bf16.msra.mxu0 0
      %827 = vmatprep.subr.bf16.mxu0 0
      %828 = vmatpush2.bf16.msra.mxu0 0
      %829 = vmatprep.subr.bf16.mxu0 0
      %830 = vmatpush2.bf16.msra.mxu0 0
      %831 = vmatprep.subr.bf16.mxu0 0
      %832 = vmatpush2.bf16.msra.mxu0 0
      %833 = vmatprep.subr.bf16.mxu0 0
      %834 = vmatpush2.bf16.msra.mxu0 0
      %835 = vmatprep.subr.bf16.mxu0 0
      %836 = vmatpush2.bf16.msra.mxu0 0
      %837 = vmatprep.subr.bf16.mxu0 0
      %838 = vmatpush2.bf16.msra.mxu0 0
      %839 = vmatprep.subr.bf16.mxu0 0
      %840 = vmatpush2.bf16.msra.mxu0 0
      %841 = vmatprep.mubr.bf16.mxu0 0
      %842 = vmatmul.mubr.bf16.gmra.mxu0 %v807
      %v843 = vpop.f32.mrf.mxu0
      %v844 = vadd.f32 0.0, %v843
      %v845 = vpop.f32.mrf.mxu0
      %v846 = vpop.f32.mrf.mxu0
      %v847 = vadd.f32 0.0, %v846
      %v848 = vpop.f32.mrf.mxu0
      %849 = vdwg.mxu0
      %851 = vrot.lane.b32.xlu0 %v659, 96
      %v852 = vpop.permute.xlu0 %851
      %v855 = vsel %vm755, %v801, 0
      %857 = vmatprep.subr.bf16.mxu0 0
      %858 = vmatpush1.bf16.msra.mxu0 0
      %859 = vmatprep.subr.bf16.mxu0 0
      %860 = vmatpush1.bf16.msra.mxu0 0
      %861 = vmatprep.subr.bf16.mxu0 0
      %862 = vmatpush1.bf16.msra.mxu0 0
      %863 = vmatprep.subr.bf16.mxu0 0
      %864 = vmatpush1.bf16.msra.mxu0 0
      %865 = vmatprep.subr.bf16.mxu0 0
      %866 = vmatpush1.bf16.msra.mxu0 0
      %867 = vmatprep.subr.bf16.mxu0 0
      %868 = vmatpush1.bf16.msra.mxu0 0
      %869 = vmatprep.subr.bf16.mxu0 0
      %870 = vmatpush1.bf16.msra.mxu0 0
      %871 = vmatprep.subr.bf16.mxu0 0
      %872 = vmatpush1.bf16.msra.mxu0 %v852
      %873 = vmatprep.subr.bf16.mxu0 0
      %874 = vmatpush2.bf16.msra.mxu0 0
      %875 = vmatprep.subr.bf16.mxu0 0
      %876 = vmatpush2.bf16.msra.mxu0 0
      %877 = vmatprep.subr.bf16.mxu0 0
      %878 = vmatpush2.bf16.msra.mxu0 0
      %879 = vmatprep.subr.bf16.mxu0 0
      %880 = vmatpush2.bf16.msra.mxu0 0
      %881 = vmatprep.subr.bf16.mxu0 0
      %882 = vmatpush2.bf16.msra.mxu0 0
      %883 = vmatprep.subr.bf16.mxu0 0
      %884 = vmatpush2.bf16.msra.mxu0 0
      %885 = vmatprep.subr.bf16.mxu0 0
      %886 = vmatpush2.bf16.msra.mxu0 0
      %887 = vmatprep.subr.bf16.mxu0 0
      %888 = vmatpush2.bf16.msra.mxu0 0
      %889 = vmatprep.mubr.bf16.mxu0 0
      %890 = vmatmul.mubr.bf16.gmra.mxu0 %v855
      %v891 = vpop.f32.mrf.mxu0
      %v892 = vadd.f32 0.0, %v891
      %v893 = vpop.f32.mrf.mxu0
      %v894 = vpop.f32.mrf.mxu0
      %v895 = vadd.f32 0.0, %v894
      %v896 = vpop.f32.mrf.mxu0
      %897 = vdwg.mxu0
      %v898 = vpack.c.bf16 %v847, %v844
      %v899 = vpack.c.bf16 %v895, %v892
      %v901 = vsel %vm660, %v898, 0
      %v904 = vsel %vm660, %v899, 0
      %vm906 = vcmask 1043456
      %v908 = vsel %vm906, %v644, 0
      %910 = vmatprep.subr.bf16.mxu0 0
      %911 = vmatpush1.bf16.msra.mxu0 0
      %912 = vmatprep.subr.bf16.mxu0 0
      %913 = vmatpush1.bf16.msra.mxu0 0
      %914 = vmatprep.subr.bf16.mxu0 0
      %915 = vmatpush1.bf16.msra.mxu0 0
      %916 = vmatprep.subr.bf16.mxu0 0
      %917 = vmatpush1.bf16.msra.mxu0 0
      %918 = vmatprep.subr.bf16.mxu0 0
      %919 = vmatpush1.bf16.msra.mxu0 0
      %920 = vmatprep.subr.bf16.mxu0 0
      %921 = vmatpush1.bf16.msra.mxu0 0
      %922 = vmatprep.subr.bf16.mxu0 0
      %923 = vmatpush1.bf16.msra.mxu0 0
      %924 = vmatprep.subr.bf16.mxu0 0
      %925 = vmatpush1.bf16.msra.mxu0 %v908
      %926 = vmatprep.subr.bf16.mxu0 0
      %927 = vmatpush2.bf16.msra.mxu0 0
      %928 = vmatprep.subr.bf16.mxu0 0
      %929 = vmatpush2.bf16.msra.mxu0 0
      %930 = vmatprep.subr.bf16.mxu0 0
      %931 = vmatpush2.bf16.msra.mxu0 0
      %932 = vmatprep.subr.bf16.mxu0 0
      %933 = vmatpush2.bf16.msra.mxu0 0
      %934 = vmatprep.subr.bf16.mxu0 0
      %935 = vmatpush2.bf16.msra.mxu0 0
      %936 = vmatprep.subr.bf16.mxu0 0
      %937 = vmatpush2.bf16.msra.mxu0 0
      %938 = vmatprep.subr.bf16.mxu0 0
      %939 = vmatpush2.bf16.msra.mxu0 0
      %940 = vmatprep.subr.bf16.mxu0 0
      %941 = vmatpush2.bf16.msra.mxu0 0
      %942 = vmatprep.mubr.bf16.mxu0 0
      %943 = vmatmul.mubr.bf16.gmra.mxu0 %v901
      %v944 = vpop.f32.mrf.mxu0
      %v945 = vadd.f32 0.0, %v944
      %v946 = vpop.f32.mrf.mxu0
      %v947 = vpop.f32.mrf.mxu0
      %v948 = vadd.f32 0.0, %v947
      %v949 = vpop.f32.mrf.mxu0
      %950 = vmatprep.mubr.bf16.mxu0 0
      %951 = vmatmul.mubr.bf16.gmra.mxu0 %v904
      %v952 = vpop.f32.mrf.mxu0
      %v953 = vadd.f32 0.0, %v952
      %v954 = vpop.f32.mrf.mxu0
      %v955 = vpop.f32.mrf.mxu0
      %v956 = vadd.f32 0.0, %v955
      %v957 = vpop.f32.mrf.mxu0
      %958 = vdwg.mxu0
      %v959 = vadd.f32 %v655, %v945
      %v960 = vadd.f32 %v655, %v948
      %v961 = vadd.f32 %v655, %v953
      %v962 = vadd.f32 %v655, %v956
      %964 = vrot.lane.b32.xlu0 %v656, 120
      %v965 = vpop.permute.xlu0 %964
      %966 = vrot.lane.b32.xlu0 %v658, 120
      %v967 = vpop.permute.xlu0 %966
      %v969 = vsel %vm660, %v965, 0
      %v972 = vsel %vm660, %v967, 0
      %974 = vmatprep.subr.bf16.mxu0 0
      %975 = vmatpush1.bf16.xpose.msra.mxu0 0
      %976 = vmatprep.subr.bf16.mxu0 0
      %977 = vmatpush1.bf16.xpose.msra.mxu0 0
      %978 = vmatprep.subr.bf16.mxu0 0
      %979 = vmatpush1.bf16.xpose.msra.mxu0 0
      %980 = vmatprep.subr.bf16.mxu0 0
      %981 = vmatpush1.bf16.xpose.msra.mxu0 0
      %982 = vmatprep.subr.bf16.mxu0 0
      %983 = vmatpush1.bf16.xpose.msra.mxu0 0
      %984 = vmatprep.subr.bf16.mxu0 0
      %985 = vmatpush1.bf16.xpose.msra.mxu0 0
      %986 = vmatprep.subr.bf16.mxu0 0
      %987 = vmatpush1.bf16.xpose.msra.mxu0 0
      %988 = vmatprep.subr.bf16.mxu0 0
      %989 = vmatpush1.bf16.xpose.msra.mxu0 %v972
      %990 = vmatprep.subr.bf16.mxu0 0
      %991 = vmatpush2.bf16.xpose.msra.mxu0 0
      %992 = vmatprep.subr.bf16.mxu0 0
      %993 = vmatpush2.bf16.xpose.msra.mxu0 0
      %994 = vmatprep.subr.bf16.mxu0 0
      %995 = vmatpush2.bf16.xpose.msra.mxu0 0
      %996 = vmatprep.subr.bf16.mxu0 0
      %997 = vmatpush2.bf16.xpose.msra.mxu0 0
      %998 = vmatprep.subr.bf16.mxu0 0
      %999 = vmatpush2.bf16.xpose.msra.mxu0 0
      %1000 = vmatprep.subr.bf16.mxu0 0
      %1001 = vmatpush2.bf16.xpose.msra.mxu0 0
      %1002 = vmatprep.subr.bf16.mxu0 0
      %1003 = vmatpush2.bf16.xpose.msra.mxu0 0
      %1004 = vmatprep.subr.bf16.mxu0 0
      %1005 = vmatpush2.bf16.xpose.msra.mxu0 0
      %1006 = vmatprep.mubr.bf16.mxu0 0
      %1007 = vmatmul.mubr.bf16.gmra.mxu0 %v969
      %v1008 = vpop.f32.mrf.mxu0
      %v1009 = vadd.f32 0.0, %v1008
      %v1010 = vpop.f32.mrf.mxu0
      %v1011 = vpop.f32.mrf.mxu0
      %v1012 = vadd.f32 0.0, %v1011
      %v1013 = vpop.f32.mrf.mxu0
      %1014 = vdwg.mxu0
      %1016 = vrot.lane.b32.xlu0 %v657, 120
      %v1017 = vpop.permute.xlu0 %1016
      %1018 = vrot.lane.b32.xlu0 %v659, 120
      %v1019 = vpop.permute.xlu0 %1018
      %v1021 = vsel %vm660, %v1017, 0
      %v1024 = vsel %vm660, %v1019, 0
      %1026 = vmatprep.subr.bf16.mxu0 0
      %1027 = vmatpush1.bf16.xpose.msra.mxu0 0
      %1028 = vmatprep.subr.bf16.mxu0 0
      %1029 = vmatpush1.bf16.xpose.msra.mxu0 0
      %1030 = vmatprep.subr.bf16.mxu0 0
      %1031 = vmatpush1.bf16.xpose.msra.mxu0 0
      %1032 = vmatprep.subr.bf16.mxu0 0
      %1033 = vmatpush1.bf16.xpose.msra.mxu0 0
      %1034 = vmatprep.subr.bf16.mxu0 0
      %1035 = vmatpush1.bf16.xpose.msra.mxu0 0
      %1036 = vmatprep.subr.bf16.mxu0 0
      %1037 = vmatpush1.bf16.xpose.msra.mxu0 0
      %1038 = vmatprep.subr.bf16.mxu0 0
      %1039 = vmatpush1.bf16.xpose.msra.mxu0 0
      %1040 = vmatprep.subr.bf16.mxu0 0
      %1041 = vmatpush1.bf16.xpose.msra.mxu0 %v1024
      %1042 = vmatprep.subr.bf16.mxu0 0
      %1043 = vmatpush2.bf16.xpose.msra.mxu0 0
      %1044 = vmatprep.subr.bf16.mxu0 0
      %1045 = vmatpush2.bf16.xpose.msra.mxu0 0
      %1046 = vmatprep.subr.bf16.mxu0 0
      %1047 = vmatpush2.bf16.xpose.msra.mxu0 0
      %1048 = vmatprep.subr.bf16.mxu0 0
      %1049 = vmatpush2.bf16.xpose.msra.mxu0 0
      %1050 = vmatprep.subr.bf16.mxu0 0
      %1051 = vmatpush2.bf16.xpose.msra.mxu0 0
      %1052 = vmatprep.subr.bf16.mxu0 0
      %1053 = vmatpush2.bf16.xpose.msra.mxu0 0
      %1054 = vmatprep.subr.bf16.mxu0 0
      %1055 = vmatpush2.bf16.xpose.msra.mxu0 0
      %1056 = vmatprep.subr.bf16.mxu0 0
      %1057 = vmatpush2.bf16.xpose.msra.mxu0 0
      %1058 = vmatprep.mubr.bf16.mxu0 0
      %1059 = vmatmul.mubr.bf16.gmra.mxu0 %v1021
      %v1060 = vpop.f32.mrf.mxu0
      %v1061 = vadd.f32 0.0, %v1060
      %v1062 = vpop.f32.mrf.mxu0
      %v1063 = vpop.f32.mrf.mxu0
      %v1064 = vadd.f32 0.0, %v1063
      %v1065 = vpop.f32.mrf.mxu0
      %1066 = vdwg.mxu0
      %v1067 = vsel %vm755, %v1009, -inf
      %1068 = vmax.xlane.f32.xlu0 %v1067
      %v1069 = vpop.xlane.xlu0 %1068
      %v1070 = vsel %vm755, %v1012, -inf
      %1071 = vmax.xlane.f32.xlu0 %v1070
      %v1072 = vpop.xlane.xlu0 %1071
      %v1073 = vsel %vm755, %v1061, -inf
      %1074 = vmax.xlane.f32.xlu0 %v1073
      %v1075 = vpop.xlane.xlu0 %1074
      %v1076 = vsel %vm755, %v1064, -inf
      %1077 = vmax.xlane.f32.xlu0 %v1076
      %v1078 = vpop.xlane.xlu0 %1077
      %v1079 = vsub.f32 %v1009, %v1069
      %v1080 = vsub.f32 %v1012, %v1072
      %v1081 = vsub.f32 %v1061, %v1075
      %v1082 = vsub.f32 %v1064, %v1078
      %v1083 = vmul.f32 %v1079, 1.442695
      %v1084 = vpow.pop %v1083
      %v1085 = vmul.f32 %v1080, 1.442695
      %v1086 = vpow.pop %v1085
      %v1087 = vmul.f32 %v1081, 1.442695
      %v1088 = vpow.pop %v1087
      %v1089 = vmul.f32 %v1082, 1.442695
      %v1090 = vpow.pop %v1089
      %v1091 = vsel %vm755, %v1084, 0.0
      %1092 = vadd.xlane.f32.xlu0 %v1091
      %v1093 = vpop.xlane.xlu0 %1092
      %v1094 = vsel %vm755, %v1086, 0.0
      %1095 = vadd.xlane.f32.xlu0 %v1094
      %v1096 = vpop.xlane.xlu0 %1095
      %v1097 = vsel %vm755, %v1088, 0.0
      %1098 = vadd.xlane.f32.xlu0 %v1097
      %v1099 = vpop.xlane.xlu0 %1098
      %v1100 = vsel %vm755, %v1090, 0.0
      %1101 = vadd.xlane.f32.xlu0 %v1100
      %v1102 = vpop.xlane.xlu0 %1101
      %v1103 = vrcp.pop %v1093
      %v1104 = vrcp.pop %v1096
      %v1105 = vrcp.pop %v1099
      %v1106 = vrcp.pop %v1102
      %v1107 = vmul.f32 %v1084, %v1103
      %v1108 = vmul.f32 %v1086, %v1104
      %v1109 = vmul.f32 %v1088, %v1105
      %v1110 = vmul.f32 %v1090, %v1106
      %v1111 = vpack.c.bf16 %v1108, %v1107
      %v1112 = vpack.c.bf16 %v1110, %v1109
      %1113 = vrot.lane.b32.xlu0 %v658, 88
      %v1114 = vpop.permute.xlu0 %1113
      %v1117 = vsel %vm755, %v1111, 0
      %1119 = vmatprep.subr.bf16.mxu0 0
      %1120 = vmatpush1.bf16.msra.mxu0 0
      %1121 = vmatprep.subr.bf16.mxu0 0
      %1122 = vmatpush1.bf16.msra.mxu0 0
      %1123 = vmatprep.subr.bf16.mxu0 0
      %1124 = vmatpush1.bf16.msra.mxu0 0
      %1125 = vmatprep.subr.bf16.mxu0 0
      %1126 = vmatpush1.bf16.msra.mxu0 0
      %1127 = vmatprep.subr.bf16.mxu0 0
      %1128 = vmatpush1.bf16.msra.mxu0 0
      %1129 = vmatprep.subr.bf16.mxu0 0
      %1130 = vmatpush1.bf16.msra.mxu0 0
      %1131 = vmatprep.subr.bf16.mxu0 0
      %1132 = vmatpush1.bf16.msra.mxu0 0
      %1133 = vmatprep.subr.bf16.mxu0 0
      %1134 = vmatpush1.bf16.msra.mxu0 %v1114
      %1135 = vmatprep.subr.bf16.mxu0 0
      %1136 = vmatpush2.bf16.msra.mxu0 0
      %1137 = vmatprep.subr.bf16.mxu0 0
      %1138 = vmatpush2.bf16.msra.mxu0 0
      %1139 = vmatprep.subr.bf16.mxu0 0
      %1140 = vmatpush2.bf16.msra.mxu0 0
      %1141 = vmatprep.subr.bf16.mxu0 0
      %1142 = vmatpush2.bf16.msra.mxu0 0
      %1143 = vmatprep.subr.bf16.mxu0 0
      %1144 = vmatpush2.bf16.msra.mxu0 0
      %1145 = vmatprep.subr.bf16.mxu0 0
      %1146 = vmatpush2.bf16.msra.mxu0 0
      %1147 = vmatprep.subr.bf16.mxu0 0
      %1148 = vmatpush2.bf16.msra.mxu0 0
      %1149 = vmatprep.subr.bf16.mxu0 0
      %1150 = vmatpush2.bf16.msra.mxu0 0
      %1151 = vmatprep.mubr.bf16.mxu0 0
      %1152 = vmatmul.mubr.bf16.gmra.mxu0 %v1117
      %v1153 = vpop.f32.mrf.mxu0
      %v1154 = vadd.f32 0.0, %v1153
      %v1155 = vpop.f32.mrf.mxu0
      %v1156 = vpop.f32.mrf.mxu0
      %v1157 = vadd.f32 0.0, %v1156
      %v1158 = vpop.f32.mrf.mxu0
      %1159 = vdwg.mxu0
      %1160 = vrot.lane.b32.xlu0 %v659, 88
      %v1161 = vpop.permute.xlu0 %1160
      %v1164 = vsel %vm755, %v1112, 0
      %1166 = vmatprep.subr.bf16.mxu0 0
      %1167 = vmatpush1.bf16.msra.mxu0 0
      %1168 = vmatprep.subr.bf16.mxu0 0
      %1169 = vmatpush1.bf16.msra.mxu0 0
      %1170 = vmatprep.subr.bf16.mxu0 0
      %1171 = vmatpush1.bf16.msra.mxu0 0
      %1172 = vmatprep.subr.bf16.mxu0 0
      %1173 = vmatpush1.bf16.msra.mxu0 0
      %1174 = vmatprep.subr.bf16.mxu0 0
      %1175 = vmatpush1.bf16.msra.mxu0 0
      %1176 = vmatprep.subr.bf16.mxu0 0
      %1177 = vmatpush1.bf16.msra.mxu0 0
      %1178 = vmatprep.subr.bf16.mxu0 0
      %1179 = vmatpush1.bf16.msra.mxu0 0
      %1180 = vmatprep.subr.bf16.mxu0 0
      %1181 = vmatpush1.bf16.msra.mxu0 %v1161
      %1182 = vmatprep.subr.bf16.mxu0 0
      %1183 = vmatpush2.bf16.msra.mxu0 0
      %1184 = vmatprep.subr.bf16.mxu0 0
      %1185 = vmatpush2.bf16.msra.mxu0 0
      %1186 = vmatprep.subr.bf16.mxu0 0
      %1187 = vmatpush2.bf16.msra.mxu0 0
      %1188 = vmatprep.subr.bf16.mxu0 0
      %1189 = vmatpush2.bf16.msra.mxu0 0
      %1190 = vmatprep.subr.bf16.mxu0 0
      %1191 = vmatpush2.bf16.msra.mxu0 0
      %1192 = vmatprep.subr.bf16.mxu0 0
      %1193 = vmatpush2.bf16.msra.mxu0 0
      %1194 = vmatprep.subr.bf16.mxu0 0
      %1195 = vmatpush2.bf16.msra.mxu0 0
      %1196 = vmatprep.subr.bf16.mxu0 0
      %1197 = vmatpush2.bf16.msra.mxu0 0
      %1198 = vmatprep.mubr.bf16.mxu0 0
      %1199 = vmatmul.mubr.bf16.gmra.mxu0 %v1164
      %v1200 = vpop.f32.mrf.mxu0
      %v1201 = vadd.f32 0.0, %v1200
      %v1202 = vpop.f32.mrf.mxu0
      %v1203 = vpop.f32.mrf.mxu0
      %v1204 = vadd.f32 0.0, %v1203
      %v1205 = vpop.f32.mrf.mxu0
      %1206 = vdwg.mxu0
      %v1207 = vpack.c.bf16 %v1157, %v1154
      %v1208 = vpack.c.bf16 %v1204, %v1201
      %v1210 = vsel %vm660, %v1207, 0
      %v1213 = vsel %vm660, %v1208, 0
      %v1216 = vsel %vm906, %v645, 0
      %1218 = vmatprep.subr.bf16.mxu0 0
      %1219 = vmatpush1.bf16.msra.mxu0 0
      %1220 = vmatprep.subr.bf16.mxu0 0
      %1221 = vmatpush1.bf16.msra.mxu0 0
      %1222 = vmatprep.subr.bf16.mxu0 0
      %1223 = vmatpush1.bf16.msra.mxu0 0
      %1224 = vmatprep.subr.bf16.mxu0 0
      %1225 = vmatpush1.bf16.msra.mxu0 0
      %1226 = vmatprep.subr.bf16.mxu0 0
      %1227 = vmatpush1.bf16.msra.mxu0 0
      %1228 = vmatprep.subr.bf16.mxu0 0
      %1229 = vmatpush1.bf16.msra.mxu0 0
      %1230 = vmatprep.subr.bf16.mxu0 0
      %1231 = vmatpush1.bf16.msra.mxu0 0
      %1232 = vmatprep.subr.bf16.mxu0 0
      %1233 = vmatpush1.bf16.msra.mxu0 %v1216
      %1234 = vmatprep.subr.bf16.mxu0 0
      %1235 = vmatpush2.bf16.msra.mxu0 0
      %1236 = vmatprep.subr.bf16.mxu0 0
      %1237 = vmatpush2.bf16.msra.mxu0 0
      %1238 = vmatprep.subr.bf16.mxu0 0
      %1239 = vmatpush2.bf16.msra.mxu0 0
      %1240 = vmatprep.subr.bf16.mxu0 0
      %1241 = vmatpush2.bf16.msra.mxu0 0
      %1242 = vmatprep.subr.bf16.mxu0 0
      %1243 = vmatpush2.bf16.msra.mxu0 0
      %1244 = vmatprep.subr.bf16.mxu0 0
      %1245 = vmatpush2.bf16.msra.mxu0 0
      %1246 = vmatprep.subr.bf16.mxu0 0
      %1247 = vmatpush2.bf16.msra.mxu0 0
      %1248 = vmatprep.subr.bf16.mxu0 0
      %1249 = vmatpush2.bf16.msra.mxu0 0
      %1250 = vmatprep.mubr.bf16.mxu0 0
      %1251 = vmatmul.mubr.bf16.gmra.mxu0 %v1210
      %v1252 = vpop.f32.mrf.mxu0
      %v1253 = vadd.f32 0.0, %v1252
      %v1254 = vpop.f32.mrf.mxu0
      %v1255 = vpop.f32.mrf.mxu0
      %v1256 = vadd.f32 0.0, %v1255
      %v1257 = vpop.f32.mrf.mxu0
      %1258 = vmatprep.mubr.bf16.mxu0 0
      %1259 = vmatmul.mubr.bf16.gmra.mxu0 %v1213
      %v1260 = vpop.f32.mrf.mxu0
      %v1261 = vadd.f32 0.0, %v1260
      %v1262 = vpop.f32.mrf.mxu0
      %v1263 = vpop.f32.mrf.mxu0
      %v1264 = vadd.f32 0.0, %v1263
      %v1265 = vpop.f32.mrf.mxu0
      %1266 = vdwg.mxu0
      %v1267 = vadd.f32 %v959, %v1253
      %v1268 = vadd.f32 %v960, %v1256
      %v1269 = vadd.f32 %v961, %v1261
      %v1270 = vadd.f32 %v962, %v1264
      %1271 = vrot.lane.b32.xlu0 %v656, 112
      %v1272 = vpop.permute.xlu0 %1271
      %1273 = vrot.lane.b32.xlu0 %v658, 112
      %v1274 = vpop.permute.xlu0 %1273
      %v1276 = vsel %vm660, %v1272, 0
      %v1279 = vsel %vm660, %v1274, 0
      %1281 = vmatprep.subr.bf16.mxu0 0
      %1282 = vmatpush1.bf16.xpose.msra.mxu0 0
      %1283 = vmatprep.subr.bf16.mxu0 0
      %1284 = vmatpush1.bf16.xpose.msra.mxu0 0
      %1285 = vmatprep.subr.bf16.mxu0 0
      %1286 = vmatpush1.bf16.xpose.msra.mxu0 0
      %1287 = vmatprep.subr.bf16.mxu0 0
      %1288 = vmatpush1.bf16.xpose.msra.mxu0 0
      %1289 = vmatprep.subr.bf16.mxu0 0
      %1290 = vmatpush1.bf16.xpose.msra.mxu0 0
      %1291 = vmatprep.subr.bf16.mxu0 0
      %1292 = vmatpush1.bf16.xpose.msra.mxu0 0
      %1293 = vmatprep.subr.bf16.mxu0 0
      %1294 = vmatpush1.bf16.xpose.msra.mxu0 0
      %1295 = vmatprep.subr.bf16.mxu0 0
      %1296 = vmatpush1.bf16.xpose.msra.mxu0 %v1279
      %1297 = vmatprep.subr.bf16.mxu0 0
      %1298 = vmatpush2.bf16.xpose.msra.mxu0 0
      %1299 = vmatprep.subr.bf16.mxu0 0
      %1300 = vmatpush2.bf16.xpose.msra.mxu0 0
      %1301 = vmatprep.subr.bf16.mxu0 0
      %1302 = vmatpush2.bf16.xpose.msra.mxu0 0
      %1303 = vmatprep.subr.bf16.mxu0 0
      %1304 = vmatpush2.bf16.xpose.msra.mxu0 0
      %1305 = vmatprep.subr.bf16.mxu0 0
      %1306 = vmatpush2.bf16.xpose.msra.mxu0 0
      %1307 = vmatprep.subr.bf16.mxu0 0
      %1308 = vmatpush2.bf16.xpose.msra.mxu0 0
      %1309 = vmatprep.subr.bf16.mxu0 0
      %1310 = vmatpush2.bf16.xpose.msra.mxu0 0
      %1311 = vmatprep.subr.bf16.mxu0 0
      %1312 = vmatpush2.bf16.xpose.msra.mxu0 0
      %1313 = vmatprep.mubr.bf16.mxu0 0
      %1314 = vmatmul.mubr.bf16.gmra.mxu0 %v1276
      %v1315 = vpop.f32.mrf.mxu0
      %v1316 = vadd.f32 0.0, %v1315
      %v1317 = vpop.f32.mrf.mxu0
      %v1318 = vpop.f32.mrf.mxu0
      %v1319 = vadd.f32 0.0, %v1318
      %v1320 = vpop.f32.mrf.mxu0
      %1321 = vdwg.mxu0
      %1322 = vrot.lane.b32.xlu0 %v657, 112
      %v1323 = vpop.permute.xlu0 %1322
      %1324 = vrot.lane.b32.xlu0 %v659, 112
      %v1325 = vpop.permute.xlu0 %1324
      %v1327 = vsel %vm660, %v1323, 0
      %v1330 = vsel %vm660, %v1325, 0
      %1332 = vmatprep.subr.bf16.mxu0 0
      %1333 = vmatpush1.bf16.xpose.msra.mxu0 0
      %1334 = vmatprep.subr.bf16.mxu0 0
      %1335 = vmatpush1.bf16.xpose.msra.mxu0 0
      %1336 = vmatprep.subr.bf16.mxu0 0
      %1337 = vmatpush1.bf16.xpose.msra.mxu0 0
      %1338 = vmatprep.subr.bf16.mxu0 0
      %1339 = vmatpush1.bf16.xpose.msra.mxu0 0
      %1340 = vmatprep.subr.bf16.mxu0 0
      %1341 = vmatpush1.bf16.xpose.msra.mxu0 0
      %1342 = vmatprep.subr.bf16.mxu0 0
      %1343 = vmatpush1.bf16.xpose.msra.mxu0 0
      %1344 = vmatprep.subr.bf16.mxu0 0
      %1345 = vmatpush1.bf16.xpose.msra.mxu0 0
      %1346 = vmatprep.subr.bf16.mxu0 0
      %1347 = vmatpush1.bf16.xpose.msra.mxu0 %v1330
      %1348 = vmatprep.subr.bf16.mxu0 0
      %1349 = vmatpush2.bf16.xpose.msra.mxu0 0
      %1350 = vmatprep.subr.bf16.mxu0 0
      %1351 = vmatpush2.bf16.xpose.msra.mxu0 0
      %1352 = vmatprep.subr.bf16.mxu0 0
      %1353 = vmatpush2.bf16.xpose.msra.mxu0 0
      %1354 = vmatprep.subr.bf16.mxu0 0
      %1355 = vmatpush2.bf16.xpose.msra.mxu0 0
      %1356 = vmatprep.subr.bf16.mxu0 0
      %1357 = vmatpush2.bf16.xpose.msra.mxu0 0
      %1358 = vmatprep.subr.bf16.mxu0 0
      %1359 = vmatpush2.bf16.xpose.msra.mxu0 0
      %1360 = vmatprep.subr.bf16.mxu0 0
      %1361 = vmatpush2.bf16.xpose.msra.mxu0 0
      %1362 = vmatprep.subr.bf16.mxu0 0
      %1363 = vmatpush2.bf16.xpose.msra.mxu0 0
      %1364 = vmatprep.mubr.bf16.mxu0 0
      %1365 = vmatmul.mubr.bf16.gmra.mxu0 %v1327
      %v1366 = vpop.f32.mrf.mxu0
      %v1367 = vadd.f32 0.0, %v1366
      %v1368 = vpop.f32.mrf.mxu0
      %v1369 = vpop.f32.mrf.mxu0
      %v1370 = vadd.f32 0.0, %v1369
      %v1371 = vpop.f32.mrf.mxu0
      %1372 = vdwg.mxu0
      %v1373 = vsel %vm755, %v1316, -inf
      %1374 = vmax.xlane.f32.xlu0 %v1373
      %v1375 = vpop.xlane.xlu0 %1374
      %v1376 = vsel %vm755, %v1319, -inf
      %1377 = vmax.xlane.f32.xlu0 %v1376
      %v1378 = vpop.xlane.xlu0 %1377
      %v1379 = vsel %vm755, %v1367, -inf
      %1380 = vmax.xlane.f32.xlu0 %v1379
      %v1381 = vpop.xlane.xlu0 %1380
      %v1382 = vsel %vm755, %v1370, -inf
      %1383 = vmax.xlane.f32.xlu0 %v1382
      %v1384 = vpop.xlane.xlu0 %1383
      %v1385 = vsub.f32 %v1316, %v1375
      %v1386 = vsub.f32 %v1319, %v1378
      %v1387 = vsub.f32 %v1367, %v1381
      %v1388 = vsub.f32 %v1370, %v1384
      %v1389 = vmul.f32 %v1385, 1.442695
      %v1390 = vpow.pop %v1389
      %v1391 = vmul.f32 %v1386, 1.442695
      %v1392 = vpow.pop %v1391
      %v1393 = vmul.f32 %v1387, 1.442695
      %v1394 = vpow.pop %v1393
      %v1395 = vmul.f32 %v1388, 1.442695
      %v1396 = vpow.pop %v1395
      %v1397 = vsel %vm755, %v1390, 0.0
      %1398 = vadd.xlane.f32.xlu0 %v1397
      %v1399 = vpop.xlane.xlu0 %1398
      %v1400 = vsel %vm755, %v1392, 0.0
      %1401 = vadd.xlane.f32.xlu0 %v1400
      %v1402 = vpop.xlane.xlu0 %1401
      %v1403 = vsel %vm755, %v1394, 0.0
      %1404 = vadd.xlane.f32.xlu0 %v1403
      %v1405 = vpop.xlane.xlu0 %1404
      %v1406 = vsel %vm755, %v1396, 0.0
      %1407 = vadd.xlane.f32.xlu0 %v1406
      %v1408 = vpop.xlane.xlu0 %1407
      %v1409 = vrcp.pop %v1399
      %v1410 = vrcp.pop %v1402
      %v1411 = vrcp.pop %v1405
      %v1412 = vrcp.pop %v1408
      %v1413 = vmul.f32 %v1390, %v1409
      %v1414 = vmul.f32 %v1392, %v1410
      %v1415 = vmul.f32 %v1394, %v1411
      %v1416 = vmul.f32 %v1396, %v1412
      %v1417 = vpack.c.bf16 %v1414, %v1413
      %v1418 = vpack.c.bf16 %v1416, %v1415
      %1419 = vrot.lane.b32.xlu0 %v658, 80
      %v1420 = vpop.permute.xlu0 %1419
      %v1423 = vsel %vm755, %v1417, 0
      %1425 = vmatprep.subr.bf16.mxu0 0
      %1426 = vmatpush1.bf16.msra.mxu0 0
      %1427 = vmatprep.subr.bf16.mxu0 0
      %1428 = vmatpush1.bf16.msra.mxu0 0
      %1429 = vmatprep.subr.bf16.mxu0 0
      %1430 = vmatpush1.bf16.msra.mxu0 0
      %1431 = vmatprep.subr.bf16.mxu0 0
      %1432 = vmatpush1.bf16.msra.mxu0 0
      %1433 = vmatprep.subr.bf16.mxu0 0
      %1434 = vmatpush1.bf16.msra.mxu0 0
      %1435 = vmatprep.subr.bf16.mxu0 0
      %1436 = vmatpush1.bf16.msra.mxu0 0
      %1437 = vmatprep.subr.bf16.mxu0 0
      %1438 = vmatpush1.bf16.msra.mxu0 0
      %1439 = vmatprep.subr.bf16.mxu0 0
      %1440 = vmatpush1.bf16.msra.mxu0 %v1420
      %1441 = vmatprep.subr.bf16.mxu0 0
      %1442 = vmatpush2.bf16.msra.mxu0 0
      %1443 = vmatprep.subr.bf16.mxu0 0
      %1444 = vmatpush2.bf16.msra.mxu0 0
      %1445 = vmatprep.subr.bf16.mxu0 0
      %1446 = vmatpush2.bf16.msra.mxu0 0
      %1447 = vmatprep.subr.bf16.mxu0 0
      %1448 = vmatpush2.bf16.msra.mxu0 0
      %1449 = vmatprep.subr.bf16.mxu0 0
      %1450 = vmatpush2.bf16.msra.mxu0 0
      %1451 = vmatprep.subr.bf16.mxu0 0
      %1452 = vmatpush2.bf16.msra.mxu0 0
      %1453 = vmatprep.subr.bf16.mxu0 0
      %1454 = vmatpush2.bf16.msra.mxu0 0
      %1455 = vmatprep.subr.bf16.mxu0 0
      %1456 = vmatpush2.bf16.msra.mxu0 0
      %1457 = vmatprep.mubr.bf16.mxu0 0
      %1458 = vmatmul.mubr.bf16.gmra.mxu0 %v1423
      %v1459 = vpop.f32.mrf.mxu0
      %v1460 = vadd.f32 0.0, %v1459
      %v1461 = vpop.f32.mrf.mxu0
      %v1462 = vpop.f32.mrf.mxu0
      %v1463 = vadd.f32 0.0, %v1462
      %v1464 = vpop.f32.mrf.mxu0
      %1465 = vdwg.mxu0
      %1466 = vrot.lane.b32.xlu0 %v659, 80
      %v1467 = vpop.permute.xlu0 %1466
      %v1470 = vsel %vm755, %v1418, 0
      %1472 = vmatprep.subr.bf16.mxu0 0
      %1473 = vmatpush1.bf16.msra.mxu0 0
      %1474 = vmatprep.subr.bf16.mxu0 0
      %1475 = vmatpush1.bf16.msra.mxu0 0
      %1476 = vmatprep.subr.bf16.mxu0 0
      %1477 = vmatpush1.bf16.msra.mxu0 0
      %1478 = vmatprep.subr.bf16.mxu0 0
      %1479 = vmatpush1.bf16.msra.mxu0 0
      %1480 = vmatprep.subr.bf16.mxu0 0
      %1481 = vmatpush1.bf16.msra.mxu0 0
      %1482 = vmatprep.subr.bf16.mxu0 0
      %1483 = vmatpush1.bf16.msra.mxu0 0
      %1484 = vmatprep.subr.bf16.mxu0 0
      %1485 = vmatpush1.bf16.msra.mxu0 0
      %1486 = vmatprep.subr.bf16.mxu0 0
      %1487 = vmatpush1.bf16.msra.mxu0 %v1467
      %1488 = vmatprep.subr.bf16.mxu0 0
      %1489 = vmatpush2.bf16.msra.mxu0 0
      %1490 = vmatprep.subr.bf16.mxu0 0
      %1491 = vmatpush2.bf16.msra.mxu0 0
      %1492 = vmatprep.subr.bf16.mxu0 0
      %1493 = vmatpush2.bf16.msra.mxu0 0
      %1494 = vmatprep.subr.bf16.mxu0 0
      %1495 = vmatpush2.bf16.msra.mxu0 0
      %1496 = vmatprep.subr.bf16.mxu0 0
      %1497 = vmatpush2.bf16.msra.mxu0 0
      %1498 = vmatprep.subr.bf16.mxu0 0
      %1499 = vmatpush2.bf16.msra.mxu0 0
      %1500 = vmatprep.subr.bf16.mxu0 0
      %1501 = vmatpush2.bf16.msra.mxu0 0
      %1502 = vmatprep.subr.bf16.mxu0 0
      %1503 = vmatpush2.bf16.msra.mxu0 0
      %1504 = vmatprep.mubr.bf16.mxu0 0
      %1505 = vmatmul.mubr.bf16.gmra.mxu0 %v1470
      %v1506 = vpop.f32.mrf.mxu0
      %v1507 = vadd.f32 0.0, %v1506
      %v1508 = vpop.f32.mrf.mxu0
      %v1509 = vpop.f32.mrf.mxu0
      %v1510 = vadd.f32 0.0, %v1509
      %v1511 = vpop.f32.mrf.mxu0
      %1512 = vdwg.mxu0
      %v1513 = vpack.c.bf16 %v1463, %v1460
      %v1514 = vpack.c.bf16 %v1510, %v1507
      %v1516 = vsel %vm660, %v1513, 0
      %v1519 = vsel %vm660, %v1514, 0
      %v1522 = vsel %vm906, %v646, 0
      %1524 = vmatprep.subr.bf16.mxu0 0
      %1525 = vmatpush1.bf16.msra.mxu0 0
      %1526 = vmatprep.subr.bf16.mxu0 0
      %1527 = vmatpush1.bf16.msra.mxu0 0
      %1528 = vmatprep.subr.bf16.mxu0 0
      %1529 = vmatpush1.bf16.msra.mxu0 0
      %1530 = vmatprep.subr.bf16.mxu0 0
      %1531 = vmatpush1.bf16.msra.mxu0 0
      %1532 = vmatprep.subr.bf16.mxu0 0
      %1533 = vmatpush1.bf16.msra.mxu0 0
      %1534 = vmatprep.subr.bf16.mxu0 0
      %1535 = vmatpush1.bf16.msra.mxu0 0
      %1536 = vmatprep.subr.bf16.mxu0 0
      %1537 = vmatpush1.bf16.msra.mxu0 0
      %1538 = vmatprep.subr.bf16.mxu0 0
      %1539 = vmatpush1.bf16.msra.mxu0 %v1522
      %1540 = vmatprep.subr.bf16.mxu0 0
      %1541 = vmatpush2.bf16.msra.mxu0 0
      %1542 = vmatprep.subr.bf16.mxu0 0
      %1543 = vmatpush2.bf16.msra.mxu0 0
      %1544 = vmatprep.subr.bf16.mxu0 0
      %1545 = vmatpush2.bf16.msra.mxu0 0
      %1546 = vmatprep.subr.bf16.mxu0 0
      %1547 = vmatpush2.bf16.msra.mxu0 0
      %1548 = vmatprep.subr.bf16.mxu0 0
      %1549 = vmatpush2.bf16.msra.mxu0 0
      %1550 = vmatprep.subr.bf16.mxu0 0
      %1551 = vmatpush2.bf16.msra.mxu0 0
      %1552 = vmatprep.subr.bf16.mxu0 0
      %1553 = vmatpush2.bf16.msra.mxu0 0
      %1554 = vmatprep.subr.bf16.mxu0 0
      %1555 = vmatpush2.bf16.msra.mxu0 0
      %1556 = vmatprep.mubr.bf16.mxu0 0
      %1557 = vmatmul.mubr.bf16.gmra.mxu0 %v1516
      %v1558 = vpop.f32.mrf.mxu0
      %v1559 = vadd.f32 0.0, %v1558
      %v1560 = vpop.f32.mrf.mxu0
      %v1561 = vpop.f32.mrf.mxu0
      %v1562 = vadd.f32 0.0, %v1561
      %v1563 = vpop.f32.mrf.mxu0
      %1564 = vmatprep.mubr.bf16.mxu0 0
      %1565 = vmatmul.mubr.bf16.gmra.mxu0 %v1519
      %v1566 = vpop.f32.mrf.mxu0
      %v1567 = vadd.f32 0.0, %v1566
      %v1568 = vpop.f32.mrf.mxu0
      %v1569 = vpop.f32.mrf.mxu0
      %v1570 = vadd.f32 0.0, %v1569
      %v1571 = vpop.f32.mrf.mxu0
      %1572 = vdwg.mxu0
      %v1573 = vadd.f32 %v1267, %v1559
      %v1574 = vadd.f32 %v1268, %v1562
      %v1575 = vadd.f32 %v1269, %v1567
      %v1576 = vadd.f32 %v1270, %v1570
      %1577 = vrot.lane.b32.xlu0 %v656, 104
      %v1578 = vpop.permute.xlu0 %1577
      %1579 = vrot.lane.b32.xlu0 %v658, 104
      %v1580 = vpop.permute.xlu0 %1579
      %v1582 = vsel %vm660, %v1578, 0
      %v1585 = vsel %vm660, %v1580, 0
      %1587 = vmatprep.subr.bf16.mxu0 0
      %1588 = vmatpush1.bf16.xpose.msra.mxu0 0
      %1589 = vmatprep.subr.bf16.mxu0 0
      %1590 = vmatpush1.bf16.xpose.msra.mxu0 0
      %1591 = vmatprep.subr.bf16.mxu0 0
      %1592 = vmatpush1.bf16.xpose.msra.mxu0 0
      %1593 = vmatprep.subr.bf16.mxu0 0
      %1594 = vmatpush1.bf16.xpose.msra.mxu0 0
      %1595 = vmatprep.subr.bf16.mxu0 0
      %1596 = vmatpush1.bf16.xpose.msra.mxu0 0
      %1597 = vmatprep.subr.bf16.mxu0 0
      %1598 = vmatpush1.bf16.xpose.msra.mxu0 0
      %1599 = vmatprep.subr.bf16.mxu0 0
      %1600 = vmatpush1.bf16.xpose.msra.mxu0 0
      %1601 = vmatprep.subr.bf16.mxu0 0
      %1602 = vmatpush1.bf16.xpose.msra.mxu0 %v1585
      %1603 = vmatprep.subr.bf16.mxu0 0
      %1604 = vmatpush2.bf16.xpose.msra.mxu0 0
      %1605 = vmatprep.subr.bf16.mxu0 0
      %1606 = vmatpush2.bf16.xpose.msra.mxu0 0
      %1607 = vmatprep.subr.bf16.mxu0 0
      %1608 = vmatpush2.bf16.xpose.msra.mxu0 0
      %1609 = vmatprep.subr.bf16.mxu0 0
      %1610 = vmatpush2.bf16.xpose.msra.mxu0 0
      %1611 = vmatprep.subr.bf16.mxu0 0
      %1612 = vmatpush2.bf16.xpose.msra.mxu0 0
      %1613 = vmatprep.subr.bf16.mxu0 0
      %1614 = vmatpush2.bf16.xpose.msra.mxu0 0
      %1615 = vmatprep.subr.bf16.mxu0 0
      %1616 = vmatpush2.bf16.xpose.msra.mxu0 0
      %1617 = vmatprep.subr.bf16.mxu0 0
      %1618 = vmatpush2.bf16.xpose.msra.mxu0 0
      %1619 = vmatprep.mubr.bf16.mxu0 0
      %1620 = vmatmul.mubr.bf16.gmra.mxu0 %v1582
      %v1621 = vpop.f32.mrf.mxu0
      %v1622 = vadd.f32 0.0, %v1621
      %v1623 = vpop.f32.mrf.mxu0
      %v1624 = vpop.f32.mrf.mxu0
      %v1625 = vadd.f32 0.0, %v1624
      %v1626 = vpop.f32.mrf.mxu0
      %1627 = vdwg.mxu0
      %1628 = vrot.lane.b32.xlu0 %v657, 104
      %v1629 = vpop.permute.xlu0 %1628
      %1630 = vrot.lane.b32.xlu0 %v659, 104
      %v1631 = vpop.permute.xlu0 %1630
      %v1633 = vsel %vm660, %v1629, 0
      %v1636 = vsel %vm660, %v1631, 0
      %1638 = vmatprep.subr.bf16.mxu0 0
      %1639 = vmatpush1.bf16.xpose.msra.mxu0 0
      %1640 = vmatprep.subr.bf16.mxu0 0
      %1641 = vmatpush1.bf16.xpose.msra.mxu0 0
      %1642 = vmatprep.subr.bf16.mxu0 0
      %1643 = vmatpush1.bf16.xpose.msra.mxu0 0
      %1644 = vmatprep.subr.bf16.mxu0 0
      %1645 = vmatpush1.bf16.xpose.msra.mxu0 0
      %1646 = vmatprep.subr.bf16.mxu0 0
      %1647 = vmatpush1.bf16.xpose.msra.mxu0 0
      %1648 = vmatprep.subr.bf16.mxu0 0
      %1649 = vmatpush1.bf16.xpose.msra.mxu0 0
      %1650 = vmatprep.subr.bf16.mxu0 0
      %1651 = vmatpush1.bf16.xpose.msra.mxu0 0
      %1652 = vmatprep.subr.bf16.mxu0 0
      %1653 = vmatpush1.bf16.xpose.msra.mxu0 %v1636
      %1654 = vmatprep.subr.bf16.mxu0 0
      %1655 = vmatpush2.bf16.xpose.msra.mxu0 0
      %1656 = vmatprep.subr.bf16.mxu0 0
      %1657 = vmatpush2.bf16.xpose.msra.mxu0 0
      %1658 = vmatprep.subr.bf16.mxu0 0
      %1659 = vmatpush2.bf16.xpose.msra.mxu0 0
      %1660 = vmatprep.subr.bf16.mxu0 0
      %1661 = vmatpush2.bf16.xpose.msra.mxu0 0
      %1662 = vmatprep.subr.bf16.mxu0 0
      %1663 = vmatpush2.bf16.xpose.msra.mxu0 0
      %1664 = vmatprep.subr.bf16.mxu0 0
      %1665 = vmatpush2.bf16.xpose.msra.mxu0 0
      %1666 = vmatprep.subr.bf16.mxu0 0
      %1667 = vmatpush2.bf16.xpose.msra.mxu0 0
      %1668 = vmatprep.subr.bf16.mxu0 0
      %1669 = vmatpush2.bf16.xpose.msra.mxu0 0
      %1670 = vmatprep.mubr.bf16.mxu0 0
      %1671 = vmatmul.mubr.bf16.gmra.mxu0 %v1633
      %v1672 = vpop.f32.mrf.mxu0
      %v1673 = vadd.f32 0.0, %v1672
      %v1674 = vpop.f32.mrf.mxu0
      %v1675 = vpop.f32.mrf.mxu0
      %v1676 = vadd.f32 0.0, %v1675
      %v1677 = vpop.f32.mrf.mxu0
      %1678 = vdwg.mxu0
      %v1679 = vsel %vm755, %v1622, -inf
      %1680 = vmax.xlane.f32.xlu0 %v1679
      %v1681 = vpop.xlane.xlu0 %1680
      %v1682 = vsel %vm755, %v1625, -inf
      %1683 = vmax.xlane.f32.xlu0 %v1682
      %v1684 = vpop.xlane.xlu0 %1683
      %v1685 = vsel %vm755, %v1673, -inf
      %1686 = vmax.xlane.f32.xlu0 %v1685
      %v1687 = vpop.xlane.xlu0 %1686
      %v1688 = vsel %vm755, %v1676, -inf
      %1689 = vmax.xlane.f32.xlu0 %v1688
      %v1690 = vpop.xlane.xlu0 %1689
      %v1691 = vsub.f32 %v1622, %v1681
      %v1692 = vsub.f32 %v1625, %v1684
      %v1693 = vsub.f32 %v1673, %v1687
      %v1694 = vsub.f32 %v1676, %v1690
      %v1695 = vmul.f32 %v1691, 1.442695
      %v1696 = vpow.pop %v1695
      %v1697 = vmul.f32 %v1692, 1.442695
      %v1698 = vpow.pop %v1697
      %v1699 = vmul.f32 %v1693, 1.442695
      %v1700 = vpow.pop %v1699
      %v1701 = vmul.f32 %v1694, 1.442695
      %v1702 = vpow.pop %v1701
      %v1703 = vsel %vm755, %v1696, 0.0
      %1704 = vadd.xlane.f32.xlu0 %v1703
      %v1705 = vpop.xlane.xlu0 %1704
      %v1706 = vsel %vm755, %v1698, 0.0
      %1707 = vadd.xlane.f32.xlu0 %v1706
      %v1708 = vpop.xlane.xlu0 %1707
      %v1709 = vsel %vm755, %v1700, 0.0
      %1710 = vadd.xlane.f32.xlu0 %v1709
      %v1711 = vpop.xlane.xlu0 %1710
      %v1712 = vsel %vm755, %v1702, 0.0
      %1713 = vadd.xlane.f32.xlu0 %v1712
      %v1714 = vpop.xlane.xlu0 %1713
      %v1715 = vrcp.pop %v1705
      %v1716 = vrcp.pop %v1708
      %v1717 = vrcp.pop %v1711
      %v1718 = vrcp.pop %v1714
      %v1719 = vmul.f32 %v1696, %v1715
      %v1720 = vmul.f32 %v1698, %v1716
      %v1721 = vmul.f32 %v1700, %v1717
      %v1722 = vmul.f32 %v1702, %v1718
      %v1723 = vpack.c.bf16 %v1720, %v1719
      %v1724 = vpack.c.bf16 %v1722, %v1721
      %1725 = vrot.lane.b32.xlu0 %v658, 72
      %v1726 = vpop.permute.xlu0 %1725
      %v1729 = vsel %vm755, %v1723, 0
      %1731 = vmatprep.subr.bf16.mxu0 0
      %1732 = vmatpush1.bf16.msra.mxu0 0
      %1733 = vmatprep.subr.bf16.mxu0 0
      %1734 = vmatpush1.bf16.msra.mxu0 0
      %1735 = vmatprep.subr.bf16.mxu0 0
      %1736 = vmatpush1.bf16.msra.mxu0 0
      %1737 = vmatprep.subr.bf16.mxu0 0
      %1738 = vmatpush1.bf16.msra.mxu0 0
      %1739 = vmatprep.subr.bf16.mxu0 0
      %1740 = vmatpush1.bf16.msra.mxu0 0
      %1741 = vmatprep.subr.bf16.mxu0 0
      %1742 = vmatpush1.bf16.msra.mxu0 0
      %1743 = vmatprep.subr.bf16.mxu0 0
      %1744 = vmatpush1.bf16.msra.mxu0 0
      %1745 = vmatprep.subr.bf16.mxu0 0
      %1746 = vmatpush1.bf16.msra.mxu0 %v1726
      %1747 = vmatprep.subr.bf16.mxu0 0
      %1748 = vmatpush2.bf16.msra.mxu0 0
      %1749 = vmatprep.subr.bf16.mxu0 0
      %1750 = vmatpush2.bf16.msra.mxu0 0
      %1751 = vmatprep.subr.bf16.mxu0 0
      %1752 = vmatpush2.bf16.msra.mxu0 0
      %1753 = vmatprep.subr.bf16.mxu0 0
      %1754 = vmatpush2.bf16.msra.mxu0 0
      %1755 = vmatprep.subr.bf16.mxu0 0
      %1756 = vmatpush2.bf16.msra.mxu0 0
      %1757 = vmatprep.subr.bf16.mxu0 0
      %1758 = vmatpush2.bf16.msra.mxu0 0
      %1759 = vmatprep.subr.bf16.mxu0 0
      %1760 = vmatpush2.bf16.msra.mxu0 0
      %1761 = vmatprep.subr.bf16.mxu0 0
      %1762 = vmatpush2.bf16.msra.mxu0 0
      %1763 = vmatprep.mubr.bf16.mxu0 0
      %1764 = vmatmul.mubr.bf16.gmra.mxu0 %v1729
      %v1765 = vpop.f32.mrf.mxu0
      %v1766 = vadd.f32 0.0, %v1765
      %v1767 = vpop.f32.mrf.mxu0
      %v1768 = vpop.f32.mrf.mxu0
      %v1769 = vadd.f32 0.0, %v1768
      %v1770 = vpop.f32.mrf.mxu0
      %1771 = vdwg.mxu0
      %1772 = vrot.lane.b32.xlu0 %v659, 72
      %v1773 = vpop.permute.xlu0 %1772
      %v1776 = vsel %vm755, %v1724, 0
      %1778 = vmatprep.subr.bf16.mxu0 0
      %1779 = vmatpush1.bf16.msra.mxu0 0
      %1780 = vmatprep.subr.bf16.mxu0 0
      %1781 = vmatpush1.bf16.msra.mxu0 0
      %1782 = vmatprep.subr.bf16.mxu0 0
      %1783 = vmatpush1.bf16.msra.mxu0 0
      %1784 = vmatprep.subr.bf16.mxu0 0
      %1785 = vmatpush1.bf16.msra.mxu0 0
      %1786 = vmatprep.subr.bf16.mxu0 0
      %1787 = vmatpush1.bf16.msra.mxu0 0
      %1788 = vmatprep.subr.bf16.mxu0 0
      %1789 = vmatpush1.bf16.msra.mxu0 0
      %1790 = vmatprep.subr.bf16.mxu0 0
      %1791 = vmatpush1.bf16.msra.mxu0 0
      %1792 = vmatprep.subr.bf16.mxu0 0
      %1793 = vmatpush1.bf16.msra.mxu0 %v1773
      %1794 = vmatprep.subr.bf16.mxu0 0
      %1795 = vmatpush2.bf16.msra.mxu0 0
      %1796 = vmatprep.subr.bf16.mxu0 0
      %1797 = vmatpush2.bf16.msra.mxu0 0
      %1798 = vmatprep.subr.bf16.mxu0 0
      %1799 = vmatpush2.bf16.msra.mxu0 0
      %1800 = vmatprep.subr.bf16.mxu0 0
      %1801 = vmatpush2.bf16.msra.mxu0 0
      %1802 = vmatprep.subr.bf16.mxu0 0
      %1803 = vmatpush2.bf16.msra.mxu0 0
      %1804 = vmatprep.subr.bf16.mxu0 0
      %1805 = vmatpush2.bf16.msra.mxu0 0
      %1806 = vmatprep.subr.bf16.mxu0 0
      %1807 = vmatpush2.bf16.msra.mxu0 0
      %1808 = vmatprep.subr.bf16.mxu0 0
      %1809 = vmatpush2.bf16.msra.mxu0 0
      %1810 = vmatprep.mubr.bf16.mxu0 0
      %1811 = vmatmul.mubr.bf16.gmra.mxu0 %v1776
      %v1812 = vpop.f32.mrf.mxu0
      %v1813 = vadd.f32 0.0, %v1812
      %v1814 = vpop.f32.mrf.mxu0
      %v1815 = vpop.f32.mrf.mxu0
      %v1816 = vadd.f32 0.0, %v1815
      %v1817 = vpop.f32.mrf.mxu0
      %1818 = vdwg.mxu0
      %v1819 = vpack.c.bf16 %v1769, %v1766
      %v1820 = vpack.c.bf16 %v1816, %v1813
      %v1822 = vsel %vm660, %v1819, 0
      %v1825 = vsel %vm660, %v1820, 0
      %v1828 = vsel %vm906, %v647, 0
      %1830 = vmatprep.subr.bf16.mxu0 0
      %1831 = vmatpush1.bf16.msra.mxu0 0
      %1832 = vmatprep.subr.bf16.mxu0 0
      %1833 = vmatpush1.bf16.msra.mxu0 0
      %1834 = vmatprep.subr.bf16.mxu0 0
      %1835 = vmatpush1.bf16.msra.mxu0 0
      %1836 = vmatprep.subr.bf16.mxu0 0
      %1837 = vmatpush1.bf16.msra.mxu0 0
      %1838 = vmatprep.subr.bf16.mxu0 0
      %1839 = vmatpush1.bf16.msra.mxu0 0
      %1840 = vmatprep.subr.bf16.mxu0 0
      %1841 = vmatpush1.bf16.msra.mxu0 0
      %1842 = vmatprep.subr.bf16.mxu0 0
      %1843 = vmatpush1.bf16.msra.mxu0 0
      %1844 = vmatprep.subr.bf16.mxu0 0
      %1845 = vmatpush1.bf16.msra.mxu0 %v1828
      %1846 = vmatprep.subr.bf16.mxu0 0
      %1847 = vmatpush2.bf16.msra.mxu0 0
      %1848 = vmatprep.subr.bf16.mxu0 0
      %1849 = vmatpush2.bf16.msra.mxu0 0
      %1850 = vmatprep.subr.bf16.mxu0 0
      %1851 = vmatpush2.bf16.msra.mxu0 0
      %1852 = vmatprep.subr.bf16.mxu0 0
      %1853 = vmatpush2.bf16.msra.mxu0 0
      %1854 = vmatprep.subr.bf16.mxu0 0
      %1855 = vmatpush2.bf16.msra.mxu0 0
      %1856 = vmatprep.subr.bf16.mxu0 0
      %1857 = vmatpush2.bf16.msra.mxu0 0
      %1858 = vmatprep.subr.bf16.mxu0 0
      %1859 = vmatpush2.bf16.msra.mxu0 0
      %1860 = vmatprep.subr.bf16.mxu0 0
      %1861 = vmatpush2.bf16.msra.mxu0 0
      %1862 = vmatprep.mubr.bf16.mxu0 0
      %1863 = vmatmul.mubr.bf16.gmra.mxu0 %v1822
      %v1864 = vpop.f32.mrf.mxu0
      %v1865 = vadd.f32 0.0, %v1864
      %v1866 = vpop.f32.mrf.mxu0
      %v1867 = vpop.f32.mrf.mxu0
      %v1868 = vadd.f32 0.0, %v1867
      %v1869 = vpop.f32.mrf.mxu0
      %1870 = vmatprep.mubr.bf16.mxu0 0
      %1871 = vmatmul.mubr.bf16.gmra.mxu0 %v1825
      %v1872 = vpop.f32.mrf.mxu0
      %v1873 = vadd.f32 0.0, %v1872
      %v1874 = vpop.f32.mrf.mxu0
      %v1875 = vpop.f32.mrf.mxu0
      %v1876 = vadd.f32 0.0, %v1875
      %v1877 = vpop.f32.mrf.mxu0
      %1878 = vdwg.mxu0
      %v1879 = vadd.f32 %v1573, %v1865
      %v1880 = vadd.f32 %v1574, %v1868
      %v1881 = vadd.f32 %v1575, %v1873
      %v1882 = vadd.f32 %v1576, %v1876
      %v1883 = vld [vmem:[%s8] sm:$0xf]
      %v1884 = vld [vmem:[%s8 + $0x4] sm:$0xf]
      %v1885 = vld [vmem:[%s8 + $0x8] sm:$0xf]
      %v1886 = vld [vmem:[%s8 + $0xc] sm:$0xf]
      %v1887 = vpack.c.bf16 %v1880, %v1879
      %v1888 = vpack.c.bf16 %v1882, %v1881
      %v1889 = vld [vmem:[%s9] sm:$0xf]
      %v1890 = vld [vmem:[%s9 + $0x4] sm:$0xf]
      %v1891 = vld [vmem:[%s9 + $0x8] sm:$0xf]
      %v1892 = vld [vmem:[%s9 + $0xc] sm:$0xf]
      %v1897 = vunpack.c.l.b16 %v1889
      %v1898 = vunpack.c.l.b16 %v1890
      %v1899 = vunpack.c.l.b16 %v1891
      %v1900 = vunpack.c.l.b16 %v1892
      %v1901 = vpack.c.b16 %v1898, %v1897
      %v1902 = vpack.c.b16 %v1900, %v1899
      %v1906 = vsel %vm510, %v1887, 0
      %v1909 = vsel %vm510, %v1888, 0
      %1911 = vmatprep.subr.bf16.mxu0 0
      %1912 = vmatpush1.bf16.msra.mxu0 0
      %1913 = vmatprep.subr.bf16.mxu0 0
      %1914 = vmatpush1.bf16.msra.mxu0 0
      %1915 = vmatprep.subr.bf16.mxu0 0
      %1916 = vmatpush1.bf16.msra.mxu0 0
      %1917 = vmatprep.subr.bf16.mxu0 0
      %1918 = vmatpush1.bf16.msra.mxu0 0
      %1919 = vmatprep.subr.bf16.mxu0 0
      %1920 = vmatpush1.bf16.msra.mxu0 0
      %1921 = vmatprep.subr.bf16.mxu0 0
      %1922 = vmatpush1.bf16.msra.mxu0 0
      %1923 = vmatprep.subr.bf16.mxu0 0
      %1924 = vmatpush1.bf16.msra.mxu0 %v1902
      %1925 = vmatprep.subr.bf16.mxu0 0
      %1926 = vmatpush1.bf16.msra.mxu0 %v1901
      %1927 = vmatprep.subr.bf16.mxu0 0
      %1928 = vmatpush2.bf16.msra.mxu0 0
      %1929 = vmatprep.subr.bf16.mxu0 0
      %1930 = vmatpush2.bf16.msra.mxu0 0
      %1931 = vmatprep.subr.bf16.mxu0 0
      %1932 = vmatpush2.bf16.msra.mxu0 0
      %1933 = vmatprep.subr.bf16.mxu0 0
      %1934 = vmatpush2.bf16.msra.mxu0 0
      %1935 = vmatprep.subr.bf16.mxu0 0
      %1936 = vmatpush2.bf16.msra.mxu0 0
      %1937 = vmatprep.subr.bf16.mxu0 0
      %1938 = vmatpush2.bf16.msra.mxu0 0
      %1939 = vmatprep.subr.bf16.mxu0 0
      %1940 = vmatpush2.bf16.msra.mxu0 0
      %1941 = vmatprep.subr.bf16.mxu0 0
      %1942 = vmatpush2.bf16.msra.mxu0 0
      %1943 = vmatprep.mubr.bf16.mxu0 0
      %1944 = vmatmul.mubr.bf16.gmra.mxu0 %v1906
      %v1945 = vpop.f32.mrf.mxu0
      %v1946 = vadd.f32 0.0, %v1945
      %v1947 = vpop.f32.mrf.mxu0
      %v1948 = vpop.f32.mrf.mxu0
      %v1949 = vadd.f32 0.0, %v1948
      %v1950 = vpop.f32.mrf.mxu0
      %1951 = vmatprep.mubr.bf16.mxu0 0
      %1952 = vmatmul.mubr.bf16.gmra.mxu0 %v1909
      %v1953 = vpop.f32.mrf.mxu0
      %v1954 = vadd.f32 0.0, %v1953
      %v1955 = vpop.f32.mrf.mxu0
      %v1956 = vpop.f32.mrf.mxu0
      %v1957 = vadd.f32 0.0, %v1956
      %v1958 = vpop.f32.mrf.mxu0
      %1959 = vdwg.mxu0
      %v1964 = vunpack.c.l.b16 %v1883
      %v1965 = vunpack.c.l.b16 %v1884
      %v1966 = vunpack.c.l.b16 %v1885
      %v1967 = vunpack.c.l.b16 %v1886
      %v1968 = vpack.c.b16 %v1965, %v1964
      %v1969 = vpack.c.b16 %v1967, %v1966
      %1972 = vmatprep.subr.bf16.mxu0 0
      %1973 = vmatpush1.bf16.msra.mxu0 0
      %1974 = vmatprep.subr.bf16.mxu0 0
      %1975 = vmatpush1.bf16.msra.mxu0 0
      %1976 = vmatprep.subr.bf16.mxu0 0
      %1977 = vmatpush1.bf16.msra.mxu0 0
      %1978 = vmatprep.subr.bf16.mxu0 0
      %1979 = vmatpush1.bf16.msra.mxu0 0
      %1980 = vmatprep.subr.bf16.mxu0 0
      %1981 = vmatpush1.bf16.msra.mxu0 0
      %1982 = vmatprep.subr.bf16.mxu0 0
      %1983 = vmatpush1.bf16.msra.mxu0 0
      %1984 = vmatprep.subr.bf16.mxu0 0
      %1985 = vmatpush1.bf16.msra.mxu0 %v1969
      %1986 = vmatprep.subr.bf16.mxu0 0
      %1987 = vmatpush1.bf16.msra.mxu0 %v1968
      %1988 = vmatprep.subr.bf16.mxu0 0
      %1989 = vmatpush2.bf16.msra.mxu0 0
      %1990 = vmatprep.subr.bf16.mxu0 0
      %1991 = vmatpush2.bf16.msra.mxu0 0
      %1992 = vmatprep.subr.bf16.mxu0 0
      %1993 = vmatpush2.bf16.msra.mxu0 0
      %1994 = vmatprep.subr.bf16.mxu0 0
      %1995 = vmatpush2.bf16.msra.mxu0 0
      %1996 = vmatprep.subr.bf16.mxu0 0
      %1997 = vmatpush2.bf16.msra.mxu0 0
      %1998 = vmatprep.subr.bf16.mxu0 0
      %1999 = vmatpush2.bf16.msra.mxu0 0
      %2000 = vmatprep.subr.bf16.mxu0 0
      %2001 = vmatpush2.bf16.msra.mxu0 0
      %2002 = vmatprep.subr.bf16.mxu0 0
      %2003 = vmatpush2.bf16.msra.mxu0 0
      %2004 = vmatprep.mubr.bf16.mxu0 0
      %2005 = vmatmul.mubr.bf16.gmra.mxu0 %v512
      %v2006 = vpop.f32.mrf.mxu0
      %v2007 = vadd.f32 %v1946, %v2006
      %v2008 = vpop.f32.mrf.mxu0
      %v2009 = vpop.f32.mrf.mxu0
      %v2010 = vadd.f32 %v1949, %v2009
      %v2011 = vpop.f32.mrf.mxu0
      %2012 = vmatprep.mubr.bf16.mxu0 0
      %2013 = vmatmul.mubr.bf16.gmra.mxu0 %v515
      %v2014 = vpop.f32.mrf.mxu0
      %v2015 = vadd.f32 %v1954, %v2014
      %v2016 = vpop.f32.mrf.mxu0
      %v2017 = vpop.f32.mrf.mxu0
      %v2018 = vadd.f32 %v1957, %v2017
      %v2019 = vpop.f32.mrf.mxu0
      %2020 = vdwg.mxu0
      %v2021 = vld [vmem:[%s10] sm:$0x1]
      %v2023 = vlaneseq
      %v2024 = vshrl.u32 %v2023, 7
      %v2025 = vsub.s32 0, %v2024
      %v2026 = vrot.slane %v2021, %v2025
      %v2028 = vadd.f32 %v2007, %v2026
      %v2029 = vadd.f32 %v2010, %v2026
      %v2030 = vadd.f32 %v2015, %v2026
      %v2031 = vadd.f32 %v2018, %v2026
      %v2032 = vmax.f32 %v2028, 0.0
      %v2033 = vmax.f32 %v2029, 0.0
      %v2034 = vmax.f32 %v2030, 0.0
      %v2035 = vmax.f32 %v2031, 0.0
      %v2036 = vpack.c.bf16 %v2033, %v2032
      %v2037 = vpack.c.bf16 %v2035, %v2034
      %v2038 = vld [vmem:[%s11] sm:$0xf]
      %v2039 = vld [vmem:[%s11 + $0x4] sm:$0xf]
      %v2040 = vld [vmem:[%s11 + $0x8] sm:$0xf]
      %v2041 = vld [vmem:[%s11 + $0xc] sm:$0xf]
      %v2042 = vld [vmem:[%s11 + $0x10] sm:$0xf]
      %v2043 = vld [vmem:[%s11 + $0x14] sm:$0xf]
      %v2044 = vld [vmem:[%s11 + $0x18] sm:$0xf]
      %v2045 = vld [vmem:[%s11 + $0x1c] sm:$0xf]
      %v2046 = vld [vmem:[%s12] sm:$0x1]
      %v2048 = vlaneseq
      %v2049 = vshrl.u32 %v2048, 7
      %v2050 = vsub.s32 0, %v2049
      %v2051 = vrot.slane %v2046, %v2050
      %v2061 = vunpack.c.l.b16 %v2038
      %v2062 = vunpack.c.l.b16 %v2039
      %v2063 = vunpack.c.l.b16 %v2040
      %v2064 = vunpack.c.l.b16 %v2041
      %v2065 = vunpack.c.l.b16 %v2042
      %v2066 = vunpack.c.l.b16 %v2043
      %v2067 = vunpack.c.l.b16 %v2044
      %v2068 = vunpack.c.l.b16 %v2045
      %v2069 = vpack.c.b16 %v2062, %v2061
      %v2070 = vpack.c.b16 %v2064, %v2063
      %v2071 = vpack.c.b16 %v2066, %v2065
      %v2072 = vpack.c.b16 %v2068, %v2067
      %vm2077 = vcmask 523264
      %v2079 = vsel %vm2077, %v2036, 0
      %v2082 = vsel %vm2077, %v2037, 0
      %2084 = vmatprep.subr.bf16.mxu0 0
      %2085 = vmatpush1.bf16.msra.mxu0 0
      %2086 = vmatprep.subr.bf16.mxu0 0
      %2087 = vmatpush1.bf16.msra.mxu0 0
      %2088 = vmatprep.subr.bf16.mxu0 0
      %2089 = vmatpush1.bf16.msra.mxu0 0
      %2090 = vmatprep.subr.bf16.mxu0 0
      %2091 = vmatpush1.bf16.msra.mxu0 0
      %2092 = vmatprep.subr.bf16.mxu0 0
      %2093 = vmatpush1.bf16.msra.mxu0 %v2072
      %2094 = vmatprep.subr.bf16.mxu0 0
      %2095 = vmatpush1.bf16.msra.mxu0 %v2071
      %2096 = vmatprep.subr.bf16.mxu0 0
      %2097 = vmatpush1.bf16.msra.mxu0 %v2070
      %2098 = vmatprep.subr.bf16.mxu0 0
      %2099 = vmatpush1.bf16.msra.mxu0 %v2069
      %2100 = vmatprep.subr.bf16.mxu0 0
      %2101 = vmatpush2.bf16.msra.mxu0 0
      %2102 = vmatprep.subr.bf16.mxu0 0
      %2103 = vmatpush2.bf16.msra.mxu0 0
      %2104 = vmatprep.subr.bf16.mxu0 0
      %2105 = vmatpush2.bf16.msra.mxu0 0
      %2106 = vmatprep.subr.bf16.mxu0 0
      %2107 = vmatpush2.bf16.msra.mxu0 0
      %2108 = vmatprep.subr.bf16.mxu0 0
      %2109 = vmatpush2.bf16.msra.mxu0 0
      %2110 = vmatprep.subr.bf16.mxu0 0
      %2111 = vmatpush2.bf16.msra.mxu0 0
      %2112 = vmatprep.subr.bf16.mxu0 0
      %2113 = vmatpush2.bf16.msra.mxu0 0
      %2114 = vmatprep.subr.bf16.mxu0 0
      %2115 = vmatpush2.bf16.msra.mxu0 0
      %2116 = vmatprep.mubr.bf16.mxu0 0
      %2117 = vmatmul.mubr.bf16.gmra.mxu0 %v2079
      %v2118 = vpop.f32.mrf.mxu0
      %v2119 = vadd.f32 %v2051, %v2118
      %v2120 = vpop.f32.mrf.mxu0
      %v2121 = vpop.f32.mrf.mxu0
      %v2122 = vadd.f32 %v2051, %v2121
      %v2123 = vpop.f32.mrf.mxu0
      %2124 = vmatprep.mubr.bf16.mxu0 0
      %2125 = vmatmul.mubr.bf16.gmra.mxu0 %v2082
      %v2126 = vpop.f32.mrf.mxu0
      %v2127 = vadd.f32 %v2051, %v2126
      %v2128 = vpop.f32.mrf.mxu0
      %v2129 = vpop.f32.mrf.mxu0
      %v2130 = vadd.f32 %v2051, %v2129
      %v2131 = vpop.f32.mrf.mxu0
      %2132 = vdwg.mxu0
      %v2133 = vadd.f32 %v475, %v2119
      %v2134 = vadd.f32 %v476, %v2122
      %v2135 = vadd.f32 %v477, %v2127
      %v2136 = vadd.f32 %v478, %v2130
      %2137 = vst.msk [vmem:[%s472] sm:$0xff] %vm510, %v2133
      %2138 = vst.msk [vmem:[%s472 + $0x8] sm:$0xff] %vm510, %v2134
      %2139 = vst.msk [vmem:[%s472 + $0x10] sm:$0xff] %vm510, %v2135
      %2140 = vst.msk [vmem:[%s472 + $0x18] sm:$0xff] %vm510, %v2136
      %s2141 = smul.u32 2, %s24
      %p2142 = scmp.lt.s32.totalorder %s2141, 3
      %s2143 = scalar_select %p2142, %s2141, 3
      %s2144 = smul.addr %s2143, 2
      %s2145 = smul.addr %s2144, 8
      %s2146 = scalar_lea.vmem %s13, %s2145
      // Predicated region
      $region73: #{gnn_layer_forward.1} parent=71 // pred_check
        %p2147 = pneg %p325
      $region74: #{gnn_layer_forward.1} parent=71 // pred_check_branch
        %2149 = sbr.rel (%p2147) target = $region76
      $region75: #{gnn_layer_forward.1} parent=71 // pred_region
        %s2150 = smul.u32 2, %s24
      $region76: #{gnn_layer_forward.1} parent=71 // pred_fallthru
        _
    $region72: #{gnn_layer_forward.1} parent=5 // pred_fallthru
      _
    %p2151 = scmp.le.s32.totalorder 2, %s19
    // Predicated region
    $region77: #{gnn_layer_forward.1} parent=5 // pred_check
      %p2152 = pneg %p2151
    $region78: #{gnn_layer_forward.1} parent=5 // pred_check_branch
      %2154 = sbr.rel (%p2152) target = $region80
    $region79: #{gnn_layer_forward.1} parent=5 // pred_region
      %s2155 = ssub.s32 %s19, 2
      // Predicated region
      $region81: #{gnn_layer_forward.1} parent=79 // pred_check
        %p2156 = pneg %p331
      $region82: #{gnn_layer_forward.1} parent=79 // pred_check_branch
        %2158 = sbr.rel (%p2156) target = $region84
      $region83: #{gnn_layer_forward.1} parent=79 // pred_region
        %s2159 = smul.u32 2, %s25
        %p2160 = scmp.lt.s32.totalorder %s2159, 3
        %s2161 = scalar_select %p2160, %s2159, 3
        %s2162 = smul.addr %s2161, 2
        %s2163 = smul.addr %s2162, 8
        %s2164 = scalar_lea.vmem %s13, %s2163
      $region84: #{gnn_layer_forward.1} parent=79 // pred_fallthru
        _
    $region80: #{gnn_layer_forward.1} parent=5 // pred_fallthru
      _
  $region6: #{gnn_layer_forward.1} parent=0 // loop_footer
    %s23 = sadd.s32 1, %s19
  $region7: #{gnn_layer_forward.1} parent=0 // loop_footer_branch
    %18 = sbr.rel target = $region3
  $region8: #{gnn_layer_forward.1} parent=0 // loop_exit
    _

</llo_original>
